<compile_context>
chip_gen: v6e
topology: v6e:2x2x1
jax: 0.10.0
libtpu: 0.0.40
codegen_flags: <defaults>
</compile_context>

<pallas_src>
import jax
import jax.numpy as jnp
from jax import lax
from jax.experimental import pallas as pl
from jax.experimental.pallas import tpu as pltpu

_TI = 128          # i-block size (sublanes); one grid step per block (sweep: 64 may help v5e vst pressure)
_TJ = 128          # lane width of one j-strip
_SUB = 8           # sublane rows per dense j-tile; one fori iteration covers _SUB*_TJ j-pixels
_BIG = 1e30        # sentinel: "no opposite-class pixel found"
_FAR = 1.5e15      # coordinate for padded pixels

# Padded pixels sit at (FAR, FAR); any real<->padded squared distance is >= FAR^2,
# which MUST exceed the BIG sentinel so the "empty opposite class" clamp catches it.
assert _FAR * _FAR > _BIG
# Note: squared distances are f32; exact for coordinate deltas up to ~2^12 per axis
# (images up to ~4096 per side), beyond which they round like the JAX reference.


def _hddt_kernel(pc_col_ref, gt_col_ref, ri_ref, ci_ref,
                 pc_row_ref, gt_row_ref, rj_ref, cj_ref, out_ref):
    # Dense j-side refs: pc_row/gt_row are (1, _SUB, L); rj/cj are (_SUB, L),
    # where L = n_pad // _SUB is a multiple of _TJ.
    L = rj_ref.shape[1]
    n_strips = L // _TJ          # fori iterations; each covers _SUB*_TJ j-pixels

    # i-side (sublane axis) data for this (batch, i-block) grid step.
    pc_logit_i = pc_col_ref[0].astype(jnp.float32)            # (TI, 1)
    gt_i = gt_col_ref[0].astype(jnp.float32)                  # (TI, 1)

    # Hoisted, loop-invariant lane-broadcasts (JAX does not CSE broadcast_in_dim;
    # doing these once removes ~4 per-vreg broadcasts from every strip iteration).
    ri_b = jnp.broadcast_to(ri_ref[...], (_TI, _TJ))          # (TI, TJ)
    ci_b = jnp.broadcast_to(ci_ref[...], (_TI, _TJ))
    pc_i_b = jnp.broadcast_to(pc_logit_i > 0.0, (_TI, _TJ))   # sigmoid(x) > 0.5 <=> x > 0
    gt_i_b = jnp.broadcast_to(gt_i > 0.5, (_TI, _TJ))

    big = jnp.float32(_BIG)
    init = jnp.full((_TI, _TJ), big, dtype=jnp.float32)

    def body(s, carry):
        pc_run, gt_run = carry
        j0 = pl.multiple_of(s * _TJ, _TJ)
        # One dense (8, 128) f32 tile (a single vreg) per array, sliced on the
        # lane axis -- the cheap, well-supported dynamic access pattern.
        r_blk = rj_ref[:, pl.ds(j0, _TJ)]                      # (_SUB, TJ)
        c_blk = cj_ref[:, pl.ds(j0, _TJ)]
        pc_blk = pc_row_ref[0, :, pl.ds(j0, _TJ)]              # (_SUB, TJ)
        gt_blk = gt_row_ref[0, :, pl.ds(j0, _TJ)]
        # Static inner loop over the 8 sublane rows: 8 x 128 j-pixels of
        # scheduler-visible VPU work per fori iteration.
        for k in range(_SUB):
            rj = r_blk[k:k + 1, :]                             # (1, TJ)
            cj = c_blk[k:k + 1, :]
            pc_j = pc_blk[k:k + 1, :] > 0.0
            gt_j = gt_blk[k:k + 1, :] > 0.5
            # On-the-fly squared distances for this strip (pure VPU work).
            dr = ri_b - rj
            dc = ci_b - cj
            d2 = dr * dr + dc * dc                             # (TI, TJ)
            # Fused update of both running minima from the single d2 computation.
            pc_run = jnp.where(pc_i_b != pc_j, jnp.minimum(pc_run, d2), pc_run)
            gt_run = jnp.where(gt_i_b != gt_j, jnp.minimum(gt_run, d2), gt_run)
        return pc_run, gt_run

    pc_run, gt_run = lax.fori_loop(0, n_strips, body, (init, init),
                                   unroll=2 if n_strips >= 2 else 1)

    # One cross-lane (XLU) reduction per running-min array, per grid step.
    pc_min = jnp.min(pc_run, axis=1, keepdims=True)            # (TI, 1)
    gt_min = jnp.min(gt_run, axis=1, keepdims=True)            # (TI, 1)
    zero = jnp.float32(0.0)
    # TODO(synk): if one class is empty scipy's distance_transform_edt has
    # different (degenerate) semantics; treat it as zero squared distance here.
    pc_d2 = jnp.where(pc_min >= big, zero, pc_min)
    gt_d2 = jnp.where(gt_min >= big, zero, gt_min)

    pred_error = (gt_i - jax.nn.sigmoid(pc_logit_i)) ** 2      # (TI, 1)
    partial = jnp.sum(pred_error * (pc_d2 + gt_d2))

    # Lane-dense, unmasked store of this grid step's partial sum.
    out_ref[...] = jnp.broadcast_to(partial.astype(jnp.float32), out_ref.shape)


def hddt_binary_loss(net_output, target):
    """net_output: (B, 2, H, W) logits;  target: (B, 1, H, W) {0,1}.  Returns scalar f32."""
    B, _, H, W = net_output.shape
    N = H * W
    blk = _SUB * _TJ                       # 1024: dense-tile granularity
    n_pad = -(-N // blk) * blk             # pad flat spatial size to a multiple of 1024
    ni = n_pad // _TI
    L = n_pad // _SUB                      # lanes per dense sublane row (multiple of 128)

    pc_logit = net_output[:, 0, :, :].astype(jnp.float32).reshape(B, N)
    gt = target[:, 0, :, :].astype(jnp.float32).reshape(B, N)
    if n_pad != N:
        pc_logit = jnp.pad(pc_logit, ((0, 0), (0, n_pad - N)))
        gt = jnp.pad(gt, ((0, 0), (0, n_pad - N)))

    # Pixel-center coordinates (f32). Padded pixels are pushed "far away" so their
    # squared distance to any real pixel exceeds the BIG sentinel and can never win
    # a min (and their own query distance gets clamped to 0 -> zero contribution).
    idx = jnp.arange(n_pad, dtype=jnp.int32)
    valid = idx < N
    r = jnp.where(valid, (idx // W).astype(jnp.float32), jnp.float32(_FAR))
    c = jnp.where(valid, (idx % W).astype(jnp.float32), jnp.float32(_FAR))

    # i-side columns (small per-block tiles, pipelined by BlockSpec).
    pc_col = pc_logit.reshape(B, n_pad, 1)
    gt_col = gt.reshape(B, n_pad, 1)
    ri_col = r.reshape(n_pad, 1)
    ci_col = c.reshape(n_pad, 1)
    # j-side, lane+sublane dense packing: element (q, j) holds flat pixel q*L + j.
    # The kernel's (strip, row) iteration covers all n_pad pixels exactly once;
    # order is irrelevant for the min.
    pc_row = pc_logit.reshape(B, _SUB, L)
    gt_row = gt.reshape(B, _SUB, L)
    rj_row = r.reshape(_SUB, L)
    cj_row = c.reshape(_SUB, L)

    out = pl.pallas_call(
        _hddt_kernel,
        out_shape=jax.ShapeDtypeStruct((B, ni, 8, 128), jnp.float32),
        grid_spec=pltpu.PrefetchScalarGridSpec(
            num_scalar_prefetch=0,
            grid=(B, ni),
            in_specs=[
                pl.BlockSpec((1, _TI, 1), lambda b, i: (b, i, 0)),      # pc_col
                pl.BlockSpec((1, _TI, 1), lambda b, i: (b, i, 0)),      # gt_col
                pl.BlockSpec((_TI, 1), lambda b, i: (i, 0)),            # ri_col
                pl.BlockSpec((_TI, 1), lambda b, i: (i, 0)),            # ci_col
                pl.BlockSpec((1, _SUB, L), lambda b, i: (b, 0, 0)),     # pc_row (dense)
                pl.BlockSpec((1, _SUB, L), lambda b, i: (b, 0, 0)),     # gt_row (dense)
                pl.BlockSpec((_SUB, L), lambda b, i: (0, 0)),           # rj_row (dense)
                pl.BlockSpec((_SUB, L), lambda b, i: (0, 0)),           # cj_row (dense)
            ],
            out_specs=pl.BlockSpec((1, 1, 8, 128), lambda b, i: (b, i, 0, 0)),
        ),
        compiler_params=pltpu.CompilerParams(
            dimension_semantics=("parallel", "parallel"),
            vmem_limit_bytes=64 * 1024 * 1024),
    )(pc_col, gt_col, ri_col, ci_col, pc_row, gt_row, rj_row, cj_row)

    # Per-(batch, i-block) partials -> scalar mean over the B*H*W real pixels.
    return jnp.sum(out[:, :, 0, 0]) / jnp.float32(B * N)


def _reference_loss(net_output, target):
    """Pure-JAX reference with the same math (brute-force exact squared EDT)."""
    B, _, H, W = net_output.shape
    N = H * W
    pc = jax.nn.sigmoid(net_output[:, 0].astype(jnp.float32)).reshape(B, N)
    gt = target[:, 0].astype(jnp.float32).reshape(B, N)
    r = jnp.arange(N) // W
    c = jnp.arange(N) % W
    d2 = ((r[:, None] - r[None, :]) ** 2 + (c[:, None] - c[None, :]) ** 2).astype(jnp.float32)

    def per_mask(mask):  # (B, N) bool -> (B, N) min sq dist to opposite class
        opp = mask[:, :, None] != mask[:, None, :]
        cand = jnp.where(opp, d2[None], _BIG)
        m = jnp.min(cand, axis=2)
        return jnp.where(m >= _BIG, 0.0, m)

    dist = per_mask(pc > 0.5) + per_mask(gt > 0.5)
    return jnp.mean((gt - pc) ** 2 * dist)


if __name__ == "__main__":
    key = jax.random.PRNGKey(0)
    k1, k2 = jax.random.split(key)
    B, H, W = 2, 16, 16
    net_output = jax.random.normal(k1, (B, 2, H, W), dtype=jnp.float32)
    target = (jax.random.uniform(k2, (B, 1, H, W)) > 0.5).astype(jnp.float32)

    loss = hddt_binary_loss(net_output, target)
    loss = jax.block_until_ready(loss)

    ref = _reference_loss(net_output, target)
    assert jnp.isfinite(loss)
    assert jnp.allclose(loss, ref, rtol=1e-4, atol=1e-4), (loss, ref)

    print("KERNEL_OK")
</pallas_src>

<mosaic_0001>
module attributes {stable_mosaic.version = 11 : i64} {
  func.func @_hddt_kernel(%arg0: i32, %arg1: i32, %arg2: memref<1x128x1xf32, #tpu.memory_space<vmem>>, %arg3: memref<1x128x1xf32, #tpu.memory_space<vmem>>, %arg4: memref<128x1xf32, #tpu.memory_space<vmem>>, %arg5: memref<128x1xf32, #tpu.memory_space<vmem>>, %arg6: memref<1x8x128xf32, #tpu.memory_space<vmem>>, %arg7: memref<1x8x128xf32, #tpu.memory_space<vmem>>, %arg8: memref<8x128xf32, #tpu.memory_space<vmem>>, %arg9: memref<8x128xf32, #tpu.memory_space<vmem>>, %arg10: memref<1x1x8x128xf32, #tpu.memory_space<vmem>>) attributes {dimension_semantics = [#tpu.dimension_semantics<parallel>, #tpu.dimension_semantics<parallel>], iteration_bounds = array<i64: 2, 8>, scalar_prefetch = 0 : i64, scratch_operands = 0 : i64, tpu.core_type = #tpu.core_type<tc>, window_params = [{transform_indices = @transform_0, window_bounds = array<i64: 1, 128, 1>}, {transform_indices = @transform_1, window_bounds = array<i64: 1, 128, 1>}, {transform_indices = @transform_2, window_bounds = array<i64: 128, 1>}, {transform_indices = @transform_3, window_bounds = array<i64: 128, 1>}, {transform_indices = @transform_4, window_bounds = array<i64: 1, 8, 128>}, {transform_indices = @transform_5, window_bounds = array<i64: 1, 8, 128>}, {pipeline_mode = #tpu.pipeline_mode<synchronous>, transform_indices = @transform_6, window_bounds = array<i64: 8, 128>}, {pipeline_mode = #tpu.pipeline_mode<synchronous>, transform_indices = @transform_7, window_bounds = array<i64: 8, 128>}, {transform_indices = @transform_8, window_bounds = array<i64: 1, 1, 8, 128>}]} {
    %c0 = arith.constant 0 : index
    %c0_0 = arith.constant 0 : index
    %c0_1 = arith.constant 0 : index
    %0 = vector.load %arg2[%c0, %c0_0, %c0_1] : memref<1x128x1xf32, #tpu.memory_space<vmem>>, vector<1x128x1xf32>
    %1 = vector.shape_cast %0 : vector<1x128x1xf32> to vector<128x1xf32>
    %c0_2 = arith.constant 0 : index
    %c0_3 = arith.constant 0 : index
    %c0_4 = arith.constant 0 : index
    %2 = vector.load %arg3[%c0_2, %c0_3, %c0_4] : memref<1x128x1xf32, #tpu.memory_space<vmem>>, vector<1x128x1xf32>
    %3 = vector.shape_cast %2 : vector<1x128x1xf32> to vector<128x1xf32>
    %c0_5 = arith.constant 0 : index
    %c0_6 = arith.constant 0 : index
    %4 = vector.load %arg4[%c0_5, %c0_6] : memref<128x1xf32, #tpu.memory_space<vmem>>, vector<128x1xf32>
    %5 = vector.shape_cast %4 : vector<128x1xf32> to vector<128x1xf32>
    %6 = vector.broadcast %5 : vector<128x1xf32> to vector<128x128xf32>
    %c0_7 = arith.constant 0 : index
    %c0_8 = arith.constant 0 : index
    %7 = vector.load %arg5[%c0_7, %c0_8] : memref<128x1xf32, #tpu.memory_space<vmem>>, vector<128x1xf32>
    %8 = vector.shape_cast %7 : vector<128x1xf32> to vector<128x1xf32>
    %9 = vector.broadcast %8 : vector<128x1xf32> to vector<128x128xf32>
    %cst = arith.constant 0.000000e+00 : f32
    %10 = vector.broadcast %cst : f32 to vector<128x1xf32>
    %11 = arith.cmpf ogt, %1, %10 : vector<128x1xf32>
    %12 = vector.shape_cast %11 : vector<128x1xi1> to vector<128x1xi1>
    %13 = vector.broadcast %12 : vector<128x1xi1> to vector<128x128xi1>
    %cst_9 = arith.constant 5.000000e-01 : f32
    %14 = vector.broadcast %cst_9 : f32 to vector<128x1xf32>
    %15 = arith.cmpf ogt, %3, %14 : vector<128x1xf32>
    %16 = vector.shape_cast %15 : vector<128x1xi1> to vector<128x1xi1>
    %17 = vector.broadcast %16 : vector<128x1xi1> to vector<128x128xi1>
    %cst_10 = arith.constant 1.000000e+30 : f32
    %18 = vector.broadcast %cst_10 : f32 to vector<128x128xf32>
    %c0_i32 = arith.constant 0 : i32
    %c128_i32 = arith.constant 128 : i32
    %19 = arith.muli %c0_i32, %c128_i32 : i32
    %20 = tpu.assume_multiple %19, 128 : i32
    %c0_11 = arith.constant 0 : index
    %21 = arith.index_cast %20 : i32 to index
    %22 = vector.load %arg8[%c0_11, %21] : memref<8x128xf32, #tpu.memory_space<vmem>>, vector<8x128xf32>
    %c0_12 = arith.constant 0 : index
    %23 = arith.index_cast %20 : i32 to index
    %24 = vector.load %arg9[%c0_12, %23] : memref<8x128xf32, #tpu.memory_space<vmem>>, vector<8x128xf32>
    %c0_13 = arith.constant 0 : index
    %c0_14 = arith.constant 0 : index
    %25 = arith.index_cast %20 : i32 to index
    %26 = vector.load %arg6[%c0_13, %c0_14, %25] : memref<1x8x128xf32, #tpu.memory_space<vmem>>, vector<1x8x128xf32>
    %27 = vector.shape_cast %26 : vector<1x8x128xf32> to vector<8x128xf32>
    %c0_15 = arith.constant 0 : index
    %c0_16 = arith.constant 0 : index
    %28 = arith.index_cast %20 : i32 to index
    %29 = vector.load %arg7[%c0_15, %c0_16, %28] : memref<1x8x128xf32, #tpu.memory_space<vmem>>, vector<1x8x128xf32>
    %30 = vector.shape_cast %29 : vector<1x8x128xf32> to vector<8x128xf32>
    %31 = vector.extract_strided_slice %22 {offsets = [0, 0], sizes = [1, 128], strides = [1, 1]} : vector<8x128xf32> to vector<1x128xf32>
    %32 = vector.extract_strided_slice %24 {offsets = [0, 0], sizes = [1, 128], strides = [1, 1]} : vector<8x128xf32> to vector<1x128xf32>
    %33 = vector.extract_strided_slice %27 {offsets = [0, 0], sizes = [1, 128], strides = [1, 1]} : vector<8x128xf32> to vector<1x128xf32>
    %cst_17 = arith.constant 0.000000e+00 : f32
    %34 = vector.broadcast %cst_17 : f32 to vector<1x128xf32>
    %35 = arith.cmpf ogt, %33, %34 : vector<1x128xf32>
    %36 = vector.extract_strided_slice %30 {offsets = [0, 0], sizes = [1, 128], strides = [1, 1]} : vector<8x128xf32> to vector<1x128xf32>
    %cst_18 = arith.constant 5.000000e-01 : f32
    %37 = vector.broadcast %cst_18 : f32 to vector<1x128xf32>
    %38 = arith.cmpf ogt, %36, %37 : vector<1x128xf32>
    %39 = vector.broadcast %31 : vector<1x128xf32> to vector<128x128xf32>
    %40 = arith.subf %6, %39 : vector<128x128xf32>
    %41 = vector.broadcast %32 : vector<1x128xf32> to vector<128x128xf32>
    %42 = arith.subf %9, %41 : vector<128x128xf32>
    %43 = arith.mulf %40, %40 : vector<128x128xf32>
    %44 = arith.mulf %42, %42 : vector<128x128xf32>
    %45 = arith.addf %43, %44 : vector<128x128xf32>
    %46 = vector.broadcast %35 : vector<1x128xi1> to vector<128x128xi1>
    %47 = vector.broadcast %46 : vector<128x128xi1> to vector<128x128xi1>
    %48 = arith.xori %13, %47 : vector<128x128xi1>
    %49 = arith.minimumf %18, %45 : vector<128x128xf32>
    %50 = arith.select %48, %49, %18 : vector<128x128xi1>, vector<128x128xf32>
    %51 = vector.broadcast %38 : vector<1x128xi1> to vector<128x128xi1>
    %52 = vector.broadcast %51 : vector<128x128xi1> to vector<128x128xi1>
    %53 = arith.xori %17, %52 : vector<128x128xi1>
    %54 = arith.minimumf %18, %45 : vector<128x128xf32>
    %55 = arith.select %53, %54, %18 : vector<128x128xi1>, vector<128x128xf32>
    %56 = vector.extract_strided_slice %22 {offsets = [1, 0], sizes = [1, 128], strides = [1, 1]} : vector<8x128xf32> to vector<1x128xf32>
    %57 = vector.extract_strided_slice %24 {offsets = [1, 0], sizes = [1, 128], strides = [1, 1]} : vector<8x128xf32> to vector<1x128xf32>
    %58 = vector.extract_strided_slice %27 {offsets = [1, 0], sizes = [1, 128], strides = [1, 1]} : vector<8x128xf32> to vector<1x128xf32>
    %cst_19 = arith.constant 0.000000e+00 : f32
    %59 = vector.broadcast %cst_19 : f32 to vector<1x128xf32>
    %60 = arith.cmpf ogt, %58, %59 : vector<1x128xf32>
    %61 = vector.extract_strided_slice %30 {offsets = [1, 0], sizes = [1, 128], strides = [1, 1]} : vector<8x128xf32> to vector<1x128xf32>
    %cst_20 = arith.constant 5.000000e-01 : f32
    %62 = vector.broadcast %cst_20 : f32 to vector<1x128xf32>
    %63 = arith.cmpf ogt, %61, %62 : vector<1x128xf32>
    %64 = vector.broadcast %56 : vector<1x128xf32> to vector<128x128xf32>
    %65 = arith.subf %6, %64 : vector<128x128xf32>
    %66 = vector.broadcast %57 : vector<1x128xf32> to vector<128x128xf32>
    %67 = arith.subf %9, %66 : vector<128x128xf32>
    %68 = arith.mulf %65, %65 : vector<128x128xf32>
    %69 = arith.mulf %67, %67 : vector<128x128xf32>
    %70 = arith.addf %68, %69 : vector<128x128xf32>
    %71 = vector.broadcast %60 : vector<1x128xi1> to vector<128x128xi1>
    %72 = vector.broadcast %71 : vector<128x128xi1> to vector<128x128xi1>
    %73 = arith.xori %13, %72 : vector<128x128xi1>
    %74 = arith.minimumf %50, %70 : vector<128x128xf32>
    %75 = arith.select %73, %74, %50 : vector<128x128xi1>, vector<128x128xf32>
    %76 = vector.broadcast %63 : vector<1x128xi1> to vector<128x128xi1>
    %77 = vector.broadcast %76 : vector<128x128xi1> to vector<128x128xi1>
    %78 = arith.xori %17, %77 : vector<128x128xi1>
    %79 = arith.minimumf %55, %70 : vector<128x128xf32>
    %80 = arith.select %78, %79, %55 : vector<128x128xi1>, vector<128x128xf32>
    %81 = vector.extract_strided_slice %22 {offsets = [2, 0], sizes = [1, 128], strides = [1, 1]} : vector<8x128xf32> to vector<1x128xf32>
    %82 = vector.extract_strided_slice %24 {offsets = [2, 0], sizes = [1, 128], strides = [1, 1]} : vector<8x128xf32> to vector<1x128xf32>
    %83 = vector.extract_strided_slice %27 {offsets = [2, 0], sizes = [1, 128], strides = [1, 1]} : vector<8x128xf32> to vector<1x128xf32>
    %cst_21 = arith.constant 0.000000e+00 : f32
    %84 = vector.broadcast %cst_21 : f32 to vector<1x128xf32>
    %85 = arith.cmpf ogt, %83, %84 : vector<1x128xf32>
    %86 = vector.extract_strided_slice %30 {offsets = [2, 0], sizes = [1, 128], strides = [1, 1]} : vector<8x128xf32> to vector<1x128xf32>
    %cst_22 = arith.constant 5.000000e-01 : f32
    %87 = vector.broadcast %cst_22 : f32 to vector<1x128xf32>
    %88 = arith.cmpf ogt, %86, %87 : vector<1x128xf32>
    %89 = vector.broadcast %81 : vector<1x128xf32> to vector<128x128xf32>
    %90 = arith.subf %6, %89 : vector<128x128xf32>
    %91 = vector.broadcast %82 : vector<1x128xf32> to vector<128x128xf32>
    %92 = arith.subf %9, %91 : vector<128x128xf32>
    %93 = arith.mulf %90, %90 : vector<128x128xf32>
    %94 = arith.mulf %92, %92 : vector<128x128xf32>
    %95 = arith.addf %93, %94 : vector<128x128xf32>
    %96 = vector.broadcast %85 : vector<1x128xi1> to vector<128x128xi1>
    %97 = vector.broadcast %96 : vector<128x128xi1> to vector<128x128xi1>
    %98 = arith.xori %13, %97 : vector<128x128xi1>
    %99 = arith.minimumf %75, %95 : vector<128x128xf32>
    %100 = arith.select %98, %99, %75 : vector<128x128xi1>, vector<128x128xf32>
    %101 = vector.broadcast %88 : vector<1x128xi1> to vector<128x128xi1>
    %102 = vector.broadcast %101 : vector<128x128xi1> to vector<128x128xi1>
    %103 = arith.xori %17, %102 : vector<128x128xi1>
    %104 = arith.minimumf %80, %95 : vector<128x128xf32>
    %105 = arith.select %103, %104, %80 : vector<128x128xi1>, vector<128x128xf32>
    %106 = vector.extract_strided_slice %22 {offsets = [3, 0], sizes = [1, 128], strides = [1, 1]} : vector<8x128xf32> to vector<1x128xf32>
    %107 = vector.extract_strided_slice %24 {offsets = [3, 0], sizes = [1, 128], strides = [1, 1]} : vector<8x128xf32> to vector<1x128xf32>
    %108 = vector.extract_strided_slice %27 {offsets = [3, 0], sizes = [1, 128], strides = [1, 1]} : vector<8x128xf32> to vector<1x128xf32>
    %cst_23 = arith.constant 0.000000e+00 : f32
    %109 = vector.broadcast %cst_23 : f32 to vector<1x128xf32>
    %110 = arith.cmpf ogt, %108, %109 : vector<1x128xf32>
    %111 = vector.extract_strided_slice %30 {offsets = [3, 0], sizes = [1, 128], strides = [1, 1]} : vector<8x128xf32> to vector<1x128xf32>
    %cst_24 = arith.constant 5.000000e-01 : f32
    %112 = vector.broadcast %cst_24 : f32 to vector<1x128xf32>
    %113 = arith.cmpf ogt, %111, %112 : vector<1x128xf32>
    %114 = vector.broadcast %106 : vector<1x128xf32> to vector<128x128xf32>
    %115 = arith.subf %6, %114 : vector<128x128xf32>
    %116 = vector.broadcast %107 : vector<1x128xf32> to vector<128x128xf32>
    %117 = arith.subf %9, %116 : vector<128x128xf32>
    %118 = arith.mulf %115, %115 : vector<128x128xf32>
    %119 = arith.mulf %117, %117 : vector<128x128xf32>
    %120 = arith.addf %118, %119 : vector<128x128xf32>
    %121 = vector.broadcast %110 : vector<1x128xi1> to vector<128x128xi1>
    %122 = vector.broadcast %121 : vector<128x128xi1> to vector<128x128xi1>
    %123 = arith.xori %13, %122 : vector<128x128xi1>
    %124 = arith.minimumf %100, %120 : vector<128x128xf32>
    %125 = arith.select %123, %124, %100 : vector<128x128xi1>, vector<128x128xf32>
    %126 = vector.broadcast %113 : vector<1x128xi1> to vector<128x128xi1>
    %127 = vector.broadcast %126 : vector<128x128xi1> to vector<128x128xi1>
    %128 = arith.xori %17, %127 : vector<128x128xi1>
    %129 = arith.minimumf %105, %120 : vector<128x128xf32>
    %130 = arith.select %128, %129, %105 : vector<128x128xi1>, vector<128x128xf32>
    %131 = vector.extract_strided_slice %22 {offsets = [4, 0], sizes = [1, 128], strides = [1, 1]} : vector<8x128xf32> to vector<1x128xf32>
    %132 = vector.extract_strided_slice %24 {offsets = [4, 0], sizes = [1, 128], strides = [1, 1]} : vector<8x128xf32> to vector<1x128xf32>
    %133 = vector.extract_strided_slice %27 {offsets = [4, 0], sizes = [1, 128], strides = [1, 1]} : vector<8x128xf32> to vector<1x128xf32>
    %cst_25 = arith.constant 0.000000e+00 : f32
    %134 = vector.broadcast %cst_25 : f32 to vector<1x128xf32>
    %135 = arith.cmpf ogt, %133, %134 : vector<1x128xf32>
    %136 = vector.extract_strided_slice %30 {offsets = [4, 0], sizes = [1, 128], strides = [1, 1]} : vector<8x128xf32> to vector<1x128xf32>
    %cst_26 = arith.constant 5.000000e-01 : f32
    %137 = vector.broadcast %cst_26 : f32 to vector<1x128xf32>
    %138 = arith.cmpf ogt, %136, %137 : vector<1x128xf32>
    %139 = vector.broadcast %131 : vector<1x128xf32> to vector<128x128xf32>
    %140 = arith.subf %6, %139 : vector<128x128xf32>
    %141 = vector.broadcast %132 : vector<1x128xf32> to vector<128x128xf32>
    %142 = arith.subf %9, %141 : vector<128x128xf32>
    %143 = arith.mulf %140, %140 : vector<128x128xf32>
    %144 = arith.mulf %142, %142 : vector<128x128xf32>
    %145 = arith.addf %143, %144 : vector<128x128xf32>
    %146 = vector.broadcast %135 : vector<1x128xi1> to vector<128x128xi1>
    %147 = vector.broadcast %146 : vector<128x128xi1> to vector<128x128xi1>
    %148 = arith.xori %13, %147 : vector<128x128xi1>
    %149 = arith.minimumf %125, %145 : vector<128x128xf32>
    %150 = arith.select %148, %149, %125 : vector<128x128xi1>, vector<128x128xf32>
    %151 = vector.broadcast %138 : vector<1x128xi1> to vector<128x128xi1>
    %152 = vector.broadcast %151 : vector<128x128xi1> to vector<128x128xi1>
    %153 = arith.xori %17, %152 : vector<128x128xi1>
    %154 = arith.minimumf %130, %145 : vector<128x128xf32>
    %155 = arith.select %153, %154, %130 : vector<128x128xi1>, vector<128x128xf32>
    %156 = vector.extract_strided_slice %22 {offsets = [5, 0], sizes = [1, 128], strides = [1, 1]} : vector<8x128xf32> to vector<1x128xf32>
    %157 = vector.extract_strided_slice %24 {offsets = [5, 0], sizes = [1, 128], strides = [1, 1]} : vector<8x128xf32> to vector<1x128xf32>
    %158 = vector.extract_strided_slice %27 {offsets = [5, 0], sizes = [1, 128], strides = [1, 1]} : vector<8x128xf32> to vector<1x128xf32>
    %cst_27 = arith.constant 0.000000e+00 : f32
    %159 = vector.broadcast %cst_27 : f32 to vector<1x128xf32>
    %160 = arith.cmpf ogt, %158, %159 : vector<1x128xf32>
    %161 = vector.extract_strided_slice %30 {offsets = [5, 0], sizes = [1, 128], strides = [1, 1]} : vector<8x128xf32> to vector<1x128xf32>
    %cst_28 = arith.constant 5.000000e-01 : f32
    %162 = vector.broadcast %cst_28 : f32 to vector<1x128xf32>
    %163 = arith.cmpf ogt, %161, %162 : vector<1x128xf32>
    %164 = vector.broadcast %156 : vector<1x128xf32> to vector<128x128xf32>
    %165 = arith.subf %6, %164 : vector<128x128xf32>
    %166 = vector.broadcast %157 : vector<1x128xf32> to vector<128x128xf32>
    %167 = arith.subf %9, %166 : vector<128x128xf32>
    %168 = arith.mulf %165, %165 : vector<128x128xf32>
    %169 = arith.mulf %167, %167 : vector<128x128xf32>
    %170 = arith.addf %168, %169 : vector<128x128xf32>
    %171 = vector.broadcast %160 : vector<1x128xi1> to vector<128x128xi1>
    %172 = vector.broadcast %171 : vector<128x128xi1> to vector<128x128xi1>
    %173 = arith.xori %13, %172 : vector<128x128xi1>
    %174 = arith.minimumf %150, %170 : vector<128x128xf32>
    %175 = arith.select %173, %174, %150 : vector<128x128xi1>, vector<128x128xf32>
    %176 = vector.broadcast %163 : vector<1x128xi1> to vector<128x128xi1>
    %177 = vector.broadcast %176 : vector<128x128xi1> to vector<128x128xi1>
    %178 = arith.xori %17, %177 : vector<128x128xi1>
    %179 = arith.minimumf %155, %170 : vector<128x128xf32>
    %180 = arith.select %178, %179, %155 : vector<128x128xi1>, vector<128x128xf32>
    %181 = vector.extract_strided_slice %22 {offsets = [6, 0], sizes = [1, 128], strides = [1, 1]} : vector<8x128xf32> to vector<1x128xf32>
    %182 = vector.extract_strided_slice %24 {offsets = [6, 0], sizes = [1, 128], strides = [1, 1]} : vector<8x128xf32> to vector<1x128xf32>
    %183 = vector.extract_strided_slice %27 {offsets = [6, 0], sizes = [1, 128], strides = [1, 1]} : vector<8x128xf32> to vector<1x128xf32>
    %cst_29 = arith.constant 0.000000e+00 : f32
    %184 = vector.broadcast %cst_29 : f32 to vector<1x128xf32>
    %185 = arith.cmpf ogt, %183, %184 : vector<1x128xf32>
    %186 = vector.extract_strided_slice %30 {offsets = [6, 0], sizes = [1, 128], strides = [1, 1]} : vector<8x128xf32> to vector<1x128xf32>
    %cst_30 = arith.constant 5.000000e-01 : f32
    %187 = vector.broadcast %cst_30 : f32 to vector<1x128xf32>
    %188 = arith.cmpf ogt, %186, %187 : vector<1x128xf32>
    %189 = vector.broadcast %181 : vector<1x128xf32> to vector<128x128xf32>
    %190 = arith.subf %6, %189 : vector<128x128xf32>
    %191 = vector.broadcast %182 : vector<1x128xf32> to vector<128x128xf32>
    %192 = arith.subf %9, %191 : vector<128x128xf32>
    %193 = arith.mulf %190, %190 : vector<128x128xf32>
    %194 = arith.mulf %192, %192 : vector<128x128xf32>
    %195 = arith.addf %193, %194 : vector<128x128xf32>
    %196 = vector.broadcast %185 : vector<1x128xi1> to vector<128x128xi1>
    %197 = vector.broadcast %196 : vector<128x128xi1> to vector<128x128xi1>
    %198 = arith.xori %13, %197 : vector<128x128xi1>
    %199 = arith.minimumf %175, %195 : vector<128x128xf32>
    %200 = arith.select %198, %199, %175 : vector<128x128xi1>, vector<128x128xf32>
    %201 = vector.broadcast %188 : vector<1x128xi1> to vector<128x128xi1>
    %202 = vector.broadcast %201 : vector<128x128xi1> to vector<128x128xi1>
    %203 = arith.xori %17, %202 : vector<128x128xi1>
    %204 = arith.minimumf %180, %195 : vector<128x128xf32>
    %205 = arith.select %203, %204, %180 : vector<128x128xi1>, vector<128x128xf32>
    %206 = vector.extract_strided_slice %22 {offsets = [7, 0], sizes = [1, 128], strides = [1, 1]} : vector<8x128xf32> to vector<1x128xf32>
    %207 = vector.extract_strided_slice %24 {offsets = [7, 0], sizes = [1, 128], strides = [1, 1]} : vector<8x128xf32> to vector<1x128xf32>
    %208 = vector.extract_strided_slice %27 {offsets = [7, 0], sizes = [1, 128], strides = [1, 1]} : vector<8x128xf32> to vector<1x128xf32>
    %cst_31 = arith.constant 0.000000e+00 : f32
    %209 = vector.broadcast %cst_31 : f32 to vector<1x128xf32>
    %210 = arith.cmpf ogt, %208, %209 : vector<1x128xf32>
    %211 = vector.extract_strided_slice %30 {offsets = [7, 0], sizes = [1, 128], strides = [1, 1]} : vector<8x128xf32> to vector<1x128xf32>
    %cst_32 = arith.constant 5.000000e-01 : f32
    %212 = vector.broadcast %cst_32 : f32 to vector<1x128xf32>
    %213 = arith.cmpf ogt, %211, %212 : vector<1x128xf32>
    %214 = vector.broadcast %206 : vector<1x128xf32> to vector<128x128xf32>
    %215 = arith.subf %6, %214 : vector<128x128xf32>
    %216 = vector.broadcast %207 : vector<1x128xf32> to vector<128x128xf32>
    %217 = arith.subf %9, %216 : vector<128x128xf32>
    %218 = arith.mulf %215, %215 : vector<128x128xf32>
    %219 = arith.mulf %217, %217 : vector<128x128xf32>
    %220 = arith.addf %218, %219 : vector<128x128xf32>
    %221 = vector.broadcast %210 : vector<1x128xi1> to vector<128x128xi1>
    %222 = vector.broadcast %221 : vector<128x128xi1> to vector<128x128xi1>
    %223 = arith.xori %13, %222 : vector<128x128xi1>
    %224 = arith.minimumf %200, %220 : vector<128x128xf32>
    %225 = arith.select %223, %224, %200 : vector<128x128xi1>, vector<128x128xf32>
    %226 = vector.broadcast %213 : vector<1x128xi1> to vector<128x128xi1>
    %227 = vector.broadcast %226 : vector<128x128xi1> to vector<128x128xi1>
    %228 = arith.xori %17, %227 : vector<128x128xi1>
    %229 = arith.minimumf %205, %220 : vector<128x128xf32>
    %230 = arith.select %228, %229, %205 : vector<128x128xi1>, vector<128x128xf32>
    %c1_i32 = arith.constant 1 : i32
    %cst_33 = arith.constant dense<0x7F800000> : vector<128xf32>
    %231 = vector.multi_reduction <minimumf>, %225, %cst_33 [1] : vector<128x128xf32> to vector<128xf32>
    %232 = vector.shape_cast %231 : vector<128xf32> to vector<128x1xf32>
    %cst_34 = arith.constant dense<0x7F800000> : vector<128xf32>
    %233 = vector.multi_reduction <minimumf>, %230, %cst_34 [1] : vector<128x128xf32> to vector<128xf32>
    %234 = vector.shape_cast %233 : vector<128xf32> to vector<128x1xf32>
    %cst_35 = arith.constant 1.000000e+30 : f32
    %235 = vector.broadcast %cst_35 : f32 to vector<128x1xf32>
    %236 = arith.cmpf oge, %232, %235 : vector<128x1xf32>
    %cst_36 = arith.constant 0.000000e+00 : f32
    %237 = vector.broadcast %cst_36 : f32 to vector<128x1xf32>
    %238 = arith.select %236, %237, %232 : vector<128x1xi1>, vector<128x1xf32>
    %cst_37 = arith.constant 1.000000e+30 : f32
    %239 = vector.broadcast %cst_37 : f32 to vector<128x1xf32>
    %240 = arith.cmpf oge, %234, %239 : vector<128x1xf32>
    %cst_38 = arith.constant 0.000000e+00 : f32
    %241 = vector.broadcast %cst_38 : f32 to vector<128x1xf32>
    %242 = arith.select %240, %241, %234 : vector<128x1xi1>, vector<128x1xf32>
    %243 = arith.negf %1 : vector<128x1xf32>
    %244 = math.exp %243 : vector<128x1xf32>
    %cst_39 = arith.constant 1.000000e+00 : f32
    %245 = vector.broadcast %cst_39 : f32 to vector<128x1xf32>
    %246 = arith.addf %245, %244 : vector<128x1xf32>
    %247 = arith.divf %245, %246 : vector<128x1xf32>
    %248 = arith.subf %3, %247 : vector<128x1xf32>
    %249 = arith.mulf %248, %248 : vector<128x1xf32>
    %250 = arith.addf %238, %242 : vector<128x1xf32>
    %251 = arith.mulf %249, %250 : vector<128x1xf32>
    %252 = vector.shape_cast %251 : vector<128x1xf32> to vector<1x128x1xf32>
    %cst_40 = arith.constant dense<0.000000e+00> : vector<1xf32>
    %253 = vector.multi_reduction <add>, %252, %cst_40 [1, 2] : vector<1x128x1xf32> to vector<1xf32>
    %254 = vector.shape_cast %253 : vector<1xf32> to vector<1x1x1xf32>
    %255 = vector.extract %254[0, 0, 0] : f32 from vector<1x1x1xf32>
    %256 = vector.broadcast %255 : f32 to vector<1x1x8x128xf32>
    %c0_41 = arith.constant 0 : index
    %c0_42 = arith.constant 0 : index
    %c0_43 = arith.constant 0 : index
    %c0_44 = arith.constant 0 : index
    %257 = vector.load %arg10[%c0_41, %c0_42, %c0_43, %c0_44] : memref<1x1x8x128xf32, #tpu.memory_space<vmem>>, vector<1x1x8x128xf32>
    tpu.vector_store %arg10[%c0_41, %c0_42, %c0_43, %c0_44], %256 {strides = array<i32>} : memref<1x1x8x128xf32, #tpu.memory_space<vmem>>, vector<1x1x8x128xf32>,
    return
  }
  func.func @transform_0(%arg0: i32, %arg1: i32) -> (i32, i32, i32) {
    %c0_i32 = arith.constant 0 : i32
    %c0_i32_0 = arith.constant 0 : i32
    return %arg0, %arg1, %c0_i32 : i32, i32, i32
  }
  func.func @transform_1(%arg0: i32, %arg1: i32) -> (i32, i32, i32) {
    %c0_i32 = arith.constant 0 : i32
    %c0_i32_0 = arith.constant 0 : i32
    return %arg0, %arg1, %c0_i32 : i32, i32, i32
  }
  func.func @transform_2(%arg0: i32, %arg1: i32) -> (i32, i32) {
    %c0_i32 = arith.constant 0 : i32
    %c0_i32_0 = arith.constant 0 : i32
    return %arg1, %c0_i32 : i32, i32
  }
  func.func @transform_3(%arg0: i32, %arg1: i32) -> (i32, i32) {
    %c0_i32 = arith.constant 0 : i32
    %c0_i32_0 = arith.constant 0 : i32
    return %arg1, %c0_i32 : i32, i32
  }
  func.func @transform_4(%arg0: i32, %arg1: i32) -> (i32, i32, i32) {
    %c0_i32 = arith.constant 0 : i32
    %c0_i32_0 = arith.constant 0 : i32
    %c0_i32_1 = arith.constant 0 : i32
    return %arg0, %c0_i32, %c0_i32_0 : i32, i32, i32
  }
  func.func @transform_5(%arg0: i32, %arg1: i32) -> (i32, i32, i32) {
    %c0_i32 = arith.constant 0 : i32
    %c0_i32_0 = arith.constant 0 : i32
    %c0_i32_1 = arith.constant 0 : i32
    return %arg0, %c0_i32, %c0_i32_0 : i32, i32, i32
  }
  func.func @transform_6(%arg0: i32, %arg1: i32) -> (i32, i32) {
    %c0_i32 = arith.constant 0 : i32
    %c0_i32_0 = arith.constant 0 : i32
    %c0_i32_1 = arith.constant 0 : i32
    return %c0_i32, %c0_i32_0 : i32, i32
  }
  func.func @transform_7(%arg0: i32, %arg1: i32) -> (i32, i32) {
    %c0_i32 = arith.constant 0 : i32
    %c0_i32_0 = arith.constant 0 : i32
    %c0_i32_1 = arith.constant 0 : i32
    return %c0_i32, %c0_i32_0 : i32, i32
  }
  func.func @transform_8(%arg0: i32, %arg1: i32) -> (i32, i32, i32, i32) {
    %c0_i32 = arith.constant 0 : i32
    %c0_i32_0 = arith.constant 0 : i32
    %c0_i32_1 = arith.constant 0 : i32
    return %arg0, %arg1, %c0_i32, %c0_i32_0 : i32, i32, i32, i32
  }
}

</mosaic_0001>

<llo_original>
// kernel: tpu_custom_call.1
$region0: #{tpu_custom_call.1}
  #allocation0 [shape = 'u32[]', space=smem, size = 0x4, offset = 0x4, fixed_abs, tag = 'smem constant byte address 0x4 - core index']
  #allocation1 [shape = 'u32[144,128]{1,0:T(1,128)}', space=vmem, size = 0x12000, scoped, tag = 'internal scratch']
  %s0 = inlined_call_operand.vmem [shape: f32[2,1024,1], index: 0, kind: input, shape index: {}]
  %s1 = inlined_call_operand.vmem [shape: f32[2,1024,1], index: 1, kind: input, shape index: {}]
  %s2 = inlined_call_operand.vmem [shape: f32[1024,1], index: 2, kind: input, shape index: {}]
  %s3 = inlined_call_operand.vmem [shape: f32[1024,1], index: 3, kind: input, shape index: {}]
  %s4 = inlined_call_operand.vmem [shape: f32[2,8,128], index: 4, kind: input, shape index: {}]
  %s5 = inlined_call_operand.vmem [shape: f32[2,8,128], index: 5, kind: input, shape index: {}]
  %s6 = inlined_call_operand.vmem [shape: f32[8,128], index: 6, kind: input, shape index: {}]
  %s7 = inlined_call_operand.vmem [shape: f32[8,128], index: 7, kind: input, shape index: {}]
  %s8 = inlined_call_operand.hbm [shape: f32[2,8,8,128], index: 8, kind: output, shape index: {}]
  %s9 = sld [smem:[#allocation0]]
  $region65: #{tpu_custom_call.1} parent=0
    _
  %s11 = ssub.s32 1, %s9
  %s12 = scalar_select 0, %s11, %s9
  $region1: #{tpu_custom_call.1} parent=0
    #allocation2 [shape = 'u8[8192]{0}', space=vmem, size = 0x2000, scoped, tag = 'output window, operand 0']
    #allocation3 [shape = 's32[2]{0}', space=sflag, size = 0x8, scoped, tag = 'scoped memory for tpu_custom_call.1']
    %13 = vsyncpa [#allocation3], 0
    %s14 = scalar_lea.sflag [#allocation3], 1
    %15 = vsyncpa %s14, 0
    loop: start=0, step=1, limit=18
    $region2: #{tpu_custom_call.1} parent=1 // loop_pre_header
      _
    $region3: #{tpu_custom_call.1} parent=1 // loop_header
      %s17 = sphi 0, %s21
      %p18 = scmp.ge.s32.totalorder %s17, 18
      %s24 = sphi 0, %s36
      %s25 = sphi 0, %s32
      %s26 = sphi 0, %s24
      %s27 = sphi 0, %s25
      %s28 = sphi 0, %s26
      %s29 = sphi 0, %s27
      %s41 = sphi 0, %s43
      %s44 = sphi 0, %s41
      %s45 = sphi 0, %s44
      %s61 = sphi 0, %s45
      %s69 = sphi 0, %s71
      %s72 = sphi 0, %s69
      %s73 = sphi 0, %s72
      %s89 = sphi 0, %s73
      %s95 = sphi 0, %s97
      %s98 = sphi 0, %s95
      %s99 = sphi 0, %s98
      %s115 = sphi 0, %s99
      %s121 = sphi 0, %s123
      %s124 = sphi 0, %s121
      %s125 = sphi 0, %s124
      %s141 = sphi 0, %s125
      %s147 = sphi 0, %s149
      %s150 = sphi 0, %s147
      %s151 = sphi 0, %s150
      %s167 = sphi 0, %s151
      %s173 = sphi 0, %s175
      %s176 = sphi 0, %s173
      %s177 = sphi 0, %s176
      %s193 = sphi 0, %s177
      %s197 = sphi 0, %s197
      %s199 = sphi 0, %s197
      %s200 = sphi 0, %s199
      %s214 = sphi 0, %s200
      %s218 = sphi 0, %s218
      %s220 = sphi 0, %s218
      %s221 = sphi 0, %s220
      %s235 = sphi 0, %s221
      %s243 = sphi 0, %s245
      %s246 = sphi 0, %s243
      %s247 = sphi 0, %s246
      %s263 = sphi 0, %s247
    $region4: #{tpu_custom_call.1} parent=1 // loop_header_branch
      %20 = sbr.rel (%p18) target = $region8
    $region5: #{tpu_custom_call.1} parent=1 // loop_body
      %s22 = ssub.s32 %s17, 1
      %s23 = ssub.s32 %s17, 2
      %s30 = sadd.s32 1, %s25
      %p31 = scmp.ge.s32.totalorder %s30, 8
      %s32 = scalar_select %p31, 0, %s30
      %s33 = sadd.s32 1, %s24
      %s34 = scalar_select %p31, %s33, %s24
      %p35 = scmp.ge.s32.totalorder %s34, 2
      %s36 = scalar_select %p35, 0, %s34
      %s37 = ssub.s32 %s24, %s36
      %s38 = ssub.s32 %s25, %s32
      %s39 = sor.u32 %s37, %s38
      %p40 = scmp.eq.s32.totalorder %s39, 0
      %s42 = sadd.s32 %s41, 1
      %s43 = scalar_select %p40, %s41, %s42
      %p46 = pneg %p40
      %p47 = scmp.eq.s32.totalorder %s17, 15
      %p48 = por %p46, %p47
      %p49 = scmp.ne.s32.totalorder %s41, %s44
      %p50 = scmp.eq.s32.totalorder %s17, 0
      %p51 = por %p49, %p50
      %p52 = scmp.ne.s32.totalorder %s41, %s44
      %p53 = scmp.eq.s32.totalorder %s22, 15
      %p54 = por %p52, %p53
      %p55 = scmp.ne.s32.totalorder %s44, %s45
      %p56 = scmp.eq.s32.totalorder %s22, 0
      %p57 = por %p55, %p56
      %p58 = scmp.ne.s32.totalorder %s44, %s45
      %p59 = scmp.eq.s32.totalorder %s23, 15
      %p60 = por %p58, %p59
      %p62 = scmp.ne.s32.totalorder %s45, %s61
      %p63 = scmp.eq.s32.totalorder %s23, 0
      %p64 = por %p62, %p63
      %s65 = ssub.s32 %s24, %s36
      %s66 = ssub.s32 %s25, %s32
      %s67 = sor.u32 %s65, %s66
      %p68 = scmp.eq.s32.totalorder %s67, 0
      %s70 = sadd.s32 %s69, 1
      %s71 = scalar_select %p68, %s69, %s70
      %p74 = pneg %p68
      %p75 = scmp.eq.s32.totalorder %s17, 15
      %p76 = por %p74, %p75
      %p77 = scmp.ne.s32.totalorder %s69, %s72
      %p78 = scmp.eq.s32.totalorder %s17, 0
      %p79 = por %p77, %p78
      %p80 = scmp.ne.s32.totalorder %s69, %s72
      %p81 = scmp.eq.s32.totalorder %s22, 15
      %p82 = por %p80, %p81
      %p83 = scmp.ne.s32.totalorder %s72, %s73
      %p84 = scmp.eq.s32.totalorder %s22, 0
      %p85 = por %p83, %p84
      %p86 = scmp.ne.s32.totalorder %s72, %s73
      %p87 = scmp.eq.s32.totalorder %s23, 15
      %p88 = por %p86, %p87
      %p90 = scmp.ne.s32.totalorder %s73, %s89
      %p91 = scmp.eq.s32.totalorder %s23, 0
      %p92 = por %p90, %p91
      %s93 = ssub.s32 %s25, %s32
      %p94 = scmp.eq.s32.totalorder %s93, 0
      %s96 = sadd.s32 %s95, 1
      %s97 = scalar_select %p94, %s95, %s96
      %p100 = pneg %p94
      %p101 = scmp.eq.s32.totalorder %s17, 15
      %p102 = por %p100, %p101
      %p103 = scmp.ne.s32.totalorder %s95, %s98
      %p104 = scmp.eq.s32.totalorder %s17, 0
      %p105 = por %p103, %p104
      %p106 = scmp.ne.s32.totalorder %s95, %s98
      %p107 = scmp.eq.s32.totalorder %s22, 15
      %p108 = por %p106, %p107
      %p109 = scmp.ne.s32.totalorder %s98, %s99
      %p110 = scmp.eq.s32.totalorder %s22, 0
      %p111 = por %p109, %p110
      %p112 = scmp.ne.s32.totalorder %s98, %s99
      %p113 = scmp.eq.s32.totalorder %s23, 15
      %p114 = por %p112, %p113
      %p116 = scmp.ne.s32.totalorder %s99, %s115
      %p117 = scmp.eq.s32.totalorder %s23, 0
      %p118 = por %p116, %p117
      %s119 = ssub.s32 %s25, %s32
      %p120 = scmp.eq.s32.totalorder %s119, 0
      %s122 = sadd.s32 %s121, 1
      %s123 = scalar_select %p120, %s121, %s122
      %p126 = pneg %p120
      %p127 = scmp.eq.s32.totalorder %s17, 15
      %p128 = por %p126, %p127
      %p129 = scmp.ne.s32.totalorder %s121, %s124
      %p130 = scmp.eq.s32.totalorder %s17, 0
      %p131 = por %p129, %p130
      %p132 = scmp.ne.s32.totalorder %s121, %s124
      %p133 = scmp.eq.s32.totalorder %s22, 15
      %p134 = por %p132, %p133
      %p135 = scmp.ne.s32.totalorder %s124, %s125
      %p136 = scmp.eq.s32.totalorder %s22, 0
      %p137 = por %p135, %p136
      %p138 = scmp.ne.s32.totalorder %s124, %s125
      %p139 = scmp.eq.s32.totalorder %s23, 15
      %p140 = por %p138, %p139
      %p142 = scmp.ne.s32.totalorder %s125, %s141
      %p143 = scmp.eq.s32.totalorder %s23, 0
      %p144 = por %p142, %p143
      %s145 = ssub.s32 %s24, %s36
      %p146 = scmp.eq.s32.totalorder %s145, 0
      %s148 = sadd.s32 %s147, 1
      %s149 = scalar_select %p146, %s147, %s148
      %p152 = pneg %p146
      %p153 = scmp.eq.s32.totalorder %s17, 15
      %p154 = por %p152, %p153
      %p155 = scmp.ne.s32.totalorder %s147, %s150
      %p156 = scmp.eq.s32.totalorder %s17, 0
      %p157 = por %p155, %p156
      %p158 = scmp.ne.s32.totalorder %s147, %s150
      %p159 = scmp.eq.s32.totalorder %s22, 15
      %p160 = por %p158, %p159
      %p161 = scmp.ne.s32.totalorder %s150, %s151
      %p162 = scmp.eq.s32.totalorder %s22, 0
      %p163 = por %p161, %p162
      %p164 = scmp.ne.s32.totalorder %s150, %s151
      %p165 = scmp.eq.s32.totalorder %s23, 15
      %p166 = por %p164, %p165
      %p168 = scmp.ne.s32.totalorder %s151, %s167
      %p169 = scmp.eq.s32.totalorder %s23, 0
      %p170 = por %p168, %p169
      %s171 = ssub.s32 %s24, %s36
      %p172 = scmp.eq.s32.totalorder %s171, 0
      %s174 = sadd.s32 %s173, 1
      %s175 = scalar_select %p172, %s173, %s174
      %p178 = pneg %p172
      %p179 = scmp.eq.s32.totalorder %s17, 15
      %p180 = por %p178, %p179
      %p181 = scmp.ne.s32.totalorder %s173, %s176
      %p182 = scmp.eq.s32.totalorder %s17, 0
      %p183 = por %p181, %p182
      %p184 = scmp.ne.s32.totalorder %s173, %s176
      %p185 = scmp.eq.s32.totalorder %s22, 15
      %p186 = por %p184, %p185
      %p187 = scmp.ne.s32.totalorder %s176, %s177
      %p188 = scmp.eq.s32.totalorder %s22, 0
      %p189 = por %p187, %p188
      %p190 = scmp.ne.s32.totalorder %s176, %s177
      %p191 = scmp.eq.s32.totalorder %s23, 15
      %p192 = por %p190, %p191
      %p194 = scmp.ne.s32.totalorder %s177, %s193
      %p195 = scmp.eq.s32.totalorder %s23, 0
      %p196 = por %p194, %p195
      %s198 = sadd.s32 %s197, 1
      %p201 = scmp.eq.s32.totalorder %s17, 15
      %p202 = scmp.ne.s32.totalorder %s197, %s199
      %p203 = scmp.eq.s32.totalorder %s17, 0
      %p204 = por %p202, %p203
      %p205 = scmp.ne.s32.totalorder %s197, %s199
      %p206 = scmp.eq.s32.totalorder %s22, 15
      %p207 = por %p205, %p206
      %p208 = scmp.ne.s32.totalorder %s199, %s200
      %p209 = scmp.eq.s32.totalorder %s22, 0
      %p210 = por %p208, %p209
      %p211 = scmp.ne.s32.totalorder %s199, %s200
      %p212 = scmp.eq.s32.totalorder %s23, 15
      %p213 = por %p211, %p212
      %p215 = scmp.ne.s32.totalorder %s200, %s214
      %p216 = scmp.eq.s32.totalorder %s23, 0
      %p217 = por %p215, %p216
      %s219 = sadd.s32 %s218, 1
      %p222 = scmp.eq.s32.totalorder %s17, 15
      %p223 = scmp.ne.s32.totalorder %s218, %s220
      %p224 = scmp.eq.s32.totalorder %s17, 0
      %p225 = por %p223, %p224
      %p226 = scmp.ne.s32.totalorder %s218, %s220
      %p227 = scmp.eq.s32.totalorder %s22, 15
      %p228 = por %p226, %p227
      %p229 = scmp.ne.s32.totalorder %s220, %s221
      %p230 = scmp.eq.s32.totalorder %s22, 0
      %p231 = por %p229, %p230
      %p232 = scmp.ne.s32.totalorder %s220, %s221
      %p233 = scmp.eq.s32.totalorder %s23, 15
      %p234 = por %p232, %p233
      %p236 = scmp.ne.s32.totalorder %s221, %s235
      %p237 = scmp.eq.s32.totalorder %s23, 0
      %p238 = por %p236, %p237
      %s239 = ssub.s32 %s24, %s36
      %s240 = ssub.s32 %s25, %s32
      %s241 = sor.u32 %s239, %s240
      %p242 = scmp.eq.s32.totalorder %s241, 0
      %s244 = sadd.s32 %s243, 1
      %s245 = scalar_select %p242, %s243, %s244
      %p248 = pneg %p242
      %p249 = scmp.eq.s32.totalorder %s17, 15
      %p250 = por %p248, %p249
      %p251 = scmp.ne.s32.totalorder %s243, %s246
      %p252 = scmp.eq.s32.totalorder %s17, 0
      %p253 = por %p251, %p252
      %p254 = scmp.ne.s32.totalorder %s243, %s246
      %p255 = scmp.eq.s32.totalorder %s22, 15
      %p256 = por %p254, %p255
      %p257 = scmp.ne.s32.totalorder %s246, %s247
      %p258 = scmp.eq.s32.totalorder %s22, 0
      %p259 = por %p257, %p258
      %p260 = scmp.ne.s32.totalorder %s246, %s247
      %p261 = scmp.eq.s32.totalorder %s23, 15
      %p262 = por %p260, %p261
      %p264 = scmp.ne.s32.totalorder %s247, %s263
      %p265 = scmp.eq.s32.totalorder %s23, 0
      %p266 = por %p264, %p265
      %p267 = scmp.le.s32.totalorder 1, %s17
      %p268 = scmp.lt.s32.totalorder %s17, 17
      %p269 = pnand %p267, %p268
      %p270 = pneg %p269
      // Predicated region
      $region9: #{tpu_custom_call.1} parent=5 // pred_check
        _
      $region10: #{tpu_custom_call.1} parent=5 // pred_check_branch
        %272 = sbr.rel (%p269) target = $region12
      $region11: #{tpu_custom_call.1} parent=5 // pred_region
        %s273 = ssub.s32 %s17, 1
        // Predicated region
        $region13: #{tpu_custom_call.1} parent=11 // pred_check
          %p274 = pneg %p210
        $region14: #{tpu_custom_call.1} parent=11 // pred_check_branch
          %276 = sbr.rel (%p274) target = $region16
        $region15: #{tpu_custom_call.1} parent=11 // pred_region
          _
        $region16: #{tpu_custom_call.1} parent=11 // pred_fallthru
          _
        // Predicated region
        $region17: #{tpu_custom_call.1} parent=11 // pred_check
          %p277 = pneg %p231
        $region18: #{tpu_custom_call.1} parent=11 // pred_check_branch
          %279 = sbr.rel (%p277) target = $region20
        $region19: #{tpu_custom_call.1} parent=11 // pred_region
          _
        $region20: #{tpu_custom_call.1} parent=11 // pred_fallthru
          _
      $region12: #{tpu_custom_call.1} parent=5 // pred_fallthru
        _
      %p280 = scmp.lt.s32.totalorder %s17, 16
      // Predicated region
      $region21: #{tpu_custom_call.1} parent=5 // pred_check
        %p281 = pneg %p280
      $region22: #{tpu_custom_call.1} parent=5 // pred_check_branch
        %283 = sbr.rel (%p281) target = $region24
      $region23: #{tpu_custom_call.1} parent=5 // pred_region
        // Predicated region
        $region25: #{tpu_custom_call.1} parent=23 // pred_check
          %p284 = pneg %p51
        $region26: #{tpu_custom_call.1} parent=23 // pred_check_branch
          %286 = sbr.rel (%p284) target = $region28
        $region27: #{tpu_custom_call.1} parent=23 // pred_region
          %s287 = smul.u32 16, %s25
          %p288 = scmp.lt.s32.totalorder %s24, 1
          %s289 = scalar_select %p288, %s24, 1
          %p290 = scmp.lt.s32.totalorder %s287, 127
          %s291 = scalar_select %p290, %s287, 127
          %s292 = smul.addr %s289, 128
          %s293 = sadd.s32 %s291, %s292
          %s294 = smul.addr %s293, 8
          %s295 = scalar_lea.vmem %s0, %s294
          %s296 = smul.u32 16, %s25
        $region28: #{tpu_custom_call.1} parent=23 // pred_fallthru
          _
        // Predicated region
        $region29: #{tpu_custom_call.1} parent=23 // pred_check
          %p297 = pneg %p79
        $region30: #{tpu_custom_call.1} parent=23 // pred_check_branch
          %299 = sbr.rel (%p297) target = $region32
        $region31: #{tpu_custom_call.1} parent=23 // pred_region
          %s300 = smul.u32 16, %s25
          %p301 = scmp.lt.s32.totalorder %s24, 1
          %s302 = scalar_select %p301, %s24, 1
          %p303 = scmp.lt.s32.totalorder %s300, 127
          %s304 = scalar_select %p303, %s300, 127
          %s305 = smul.addr %s302, 128
          %s306 = sadd.s32 %s304, %s305
          %s307 = smul.addr %s306, 8
          %s308 = scalar_lea.vmem %s1, %s307
          %s309 = smul.u32 16, %s25
        $region32: #{tpu_custom_call.1} parent=23 // pred_fallthru
          _
        // Predicated region
        $region33: #{tpu_custom_call.1} parent=23 // pred_check
          %p310 = pneg %p105
        $region34: #{tpu_custom_call.1} parent=23 // pred_check_branch
          %312 = sbr.rel (%p310) target = $region36
        $region35: #{tpu_custom_call.1} parent=23 // pred_region
          %s313 = smul.u32 16, %s25
          %p314 = scmp.lt.s32.totalorder %s313, 127
          %s315 = scalar_select %p314, %s313, 127
          %s316 = smul.addr %s315, 8
          %s317 = scalar_lea.vmem %s2, %s316
          %s318 = smul.u32 16, %s25
        $region36: #{tpu_custom_call.1} parent=23 // pred_fallthru
          _
        // Predicated region
        $region37: #{tpu_custom_call.1} parent=23 // pred_check
          %p319 = pneg %p131
        $region38: #{tpu_custom_call.1} parent=23 // pred_check_branch
          %321 = sbr.rel (%p319) target = $region40
        $region39: #{tpu_custom_call.1} parent=23 // pred_region
          %s322 = smul.u32 16, %s25
          %p323 = scmp.lt.s32.totalorder %s322, 127
          %s324 = scalar_select %p323, %s322, 127
          %s325 = smul.addr %s324, 8
          %s326 = scalar_lea.vmem %s3, %s325
          %s327 = smul.u32 16, %s25
        $region40: #{tpu_custom_call.1} parent=23 // pred_fallthru
          _
        // Predicated region
        $region41: #{tpu_custom_call.1} parent=23 // pred_check
          %p328 = pneg %p157
        $region42: #{tpu_custom_call.1} parent=23 // pred_check_branch
          %330 = sbr.rel (%p328) target = $region44
        $region43: #{tpu_custom_call.1} parent=23 // pred_region
          %p331 = scmp.lt.s32.totalorder %s24, 1
          %s332 = scalar_select %p331, %s24, 1
          %s333 = smul.addr %s332, 8
          %s334 = scalar_lea.vmem %s4, %s333
        $region44: #{tpu_custom_call.1} parent=23 // pred_fallthru
          _
        // Predicated region
        $region45: #{tpu_custom_call.1} parent=23 // pred_check
          %p335 = pneg %p183
        $region46: #{tpu_custom_call.1} parent=23 // pred_check_branch
          %337 = sbr.rel (%p335) target = $region48
        $region47: #{tpu_custom_call.1} parent=23 // pred_region
          %p338 = scmp.lt.s32.totalorder %s24, 1
          %s339 = scalar_select %p338, %s24, 1
          %s340 = smul.addr %s339, 8
          %s341 = scalar_lea.vmem %s5, %s340
        $region48: #{tpu_custom_call.1} parent=23 // pred_fallthru
          _
      $region24: #{tpu_custom_call.1} parent=5 // pred_fallthru
        _
      %p342 = scmp.le.s32.totalorder 1, %s17
      %p343 = scmp.lt.s32.totalorder %s17, 17
      %p344 = pnand %p342, %p343
      %p345 = pneg %p344
      // Predicated region
      $region49: #{tpu_custom_call.1} parent=5 // pred_check
        _
      $region50: #{tpu_custom_call.1} parent=5 // pred_check_branch
        %347 = sbr.rel (%p344) target = $region52
      $region51: #{tpu_custom_call.1} parent=5 // pred_region
        %s348 = ssub.s32 %s17, 1
        %s349 = smul.u32 16, %s27
        %p350 = scmp.lt.s32.totalorder %s26, 1
        %s351 = scalar_select %p350, %s26, 1
        %p352 = scmp.lt.s32.totalorder %s349, 127
        %s353 = scalar_select %p352, %s349, 127
        %s354 = smul.addr %s351, 128
        %s355 = sadd.s32 %s353, %s354
        %s356 = smul.addr %s355, 8
        %s357 = scalar_lea.vmem %s0, %s356
        %p358 = pneg %p57
        %p359 = pneg %p54
        %s360 = smul.u32 16, %s27
        %p361 = scmp.lt.s32.totalorder %s26, 1
        %s362 = scalar_select %p361, %s26, 1
        %p363 = scmp.lt.s32.totalorder %s360, 127
        %s364 = scalar_select %p363, %s360, 127
        %s365 = smul.addr %s362, 128
        %s366 = sadd.s32 %s364, %s365
        %s367 = smul.addr %s366, 8
        %s368 = scalar_lea.vmem %s1, %s367
        %p369 = pneg %p85
        %p370 = pneg %p82
        %s371 = smul.u32 16, %s27
        %p372 = scmp.lt.s32.totalorder %s371, 127
        %s373 = scalar_select %p372, %s371, 127
        %s374 = smul.addr %s373, 8
        %s375 = scalar_lea.vmem %s2, %s374
        %p376 = pneg %p111
        %p377 = pneg %p108
        %s378 = smul.u32 16, %s27
        %p379 = scmp.lt.s32.totalorder %s378, 127
        %s380 = scalar_select %p379, %s378, 127
        %s381 = smul.addr %s380, 8
        %s382 = scalar_lea.vmem %s3, %s381
        %p383 = pneg %p137
        %p384 = pneg %p134
        %p385 = scmp.lt.s32.totalorder %s26, 1
        %s386 = scalar_select %p385, %s26, 1
        %s387 = smul.addr %s386, 8
        %s388 = scalar_lea.vmem %s4, %s387
        %p389 = pneg %p163
        %p390 = pneg %p160
        %p391 = scmp.lt.s32.totalorder %s26, 1
        %s392 = scalar_select %p391, %s26, 1
        %s393 = smul.addr %s392, 8
        %s394 = scalar_lea.vmem %s5, %s393
        %p395 = pneg %p189
        %p396 = pneg %p186
        %p397 = pneg %p210
        %p398 = pneg %p207
        %p399 = pneg %p231
        %p400 = pneg %p228
        %p401 = pneg %p259
        %p402 = pneg %p256
        %s403 = sand.u32 %s246, 1
        %s404 = scalar_lea.sflag [#allocation3], %s403
        %s405 = sand.u32 %s246, 1
        %s406 = smul.addr %s405, 8
        %s407 = scalar_lea.vmem [#allocation2], %s406
        %s408 = smul.u32 16, %s27
        %p409 = scmp.lt.s32.totalorder %s26, 1
        %s410 = scalar_select %p409, %s26, 1
        %p411 = scmp.lt.s32.totalorder %s408, 127
        %s412 = scalar_select %p411, %s408, 127
        %s413 = smul.addr %s410, 128
        %s414 = sadd.s32 %s412, %s413
        %s415 = smul.addr %s414, 8
        %s416 = scalar_lea.vmem %s0, %s415
        %s417 = smul.u32 16, %s27
        %s418 = smul.u32 16, %s27
        %p419 = scmp.lt.s32.totalorder %s26, 1
        %s420 = scalar_select %p419, %s26, 1
        %p421 = scmp.lt.s32.totalorder %s418, 127
        %s422 = scalar_select %p421, %s418, 127
        %s423 = smul.addr %s420, 128
        %s424 = sadd.s32 %s422, %s423
        %s425 = smul.addr %s424, 8
        %s426 = scalar_lea.vmem %s1, %s425
        %s427 = smul.u32 16, %s27
        %s428 = smul.u32 16, %s27
        %p429 = scmp.lt.s32.totalorder %s428, 127
        %s430 = scalar_select %p429, %s428, 127
        %s431 = smul.addr %s430, 8
        %s432 = scalar_lea.vmem %s2, %s431
        %s433 = smul.u32 16, %s27
        %s434 = smul.u32 16, %s27
        %p435 = scmp.lt.s32.totalorder %s434, 127
        %s436 = scalar_select %p435, %s434, 127
        %s437 = smul.addr %s436, 8
        %s438 = scalar_lea.vmem %s3, %s437
        %s439 = smul.u32 16, %s27
        %p440 = scmp.lt.s32.totalorder %s26, 1
        %s441 = scalar_select %p440, %s26, 1
        %s442 = smul.addr %s441, 8
        %s443 = scalar_lea.vmem %s4, %s442
        %p444 = scmp.lt.s32.totalorder %s26, 1
        %s445 = scalar_select %p444, %s26, 1
        %s446 = smul.addr %s445, 8
        %s447 = scalar_lea.vmem %s5, %s446
        %v448 = vld [vmem:[%s416] sm:$0xff]
        %v449 = vld [vmem:[%s416 + $0x8] sm:$0xff]
        %v450 = vld [vmem:[%s416 + $0x10] sm:$0xff]
        %v451 = vld [vmem:[%s416 + $0x18] sm:$0xff]
        %v452 = vld [vmem:[%s416 + $0x20] sm:$0xff]
        %v453 = vld [vmem:[%s416 + $0x28] sm:$0xff]
        %v454 = vld [vmem:[%s416 + $0x30] sm:$0xff]
        %v455 = vld [vmem:[%s416 + $0x38] sm:$0xff]
        %v456 = vld [vmem:[%s416 + $0x40] sm:$0xff]
        %v457 = vld [vmem:[%s416 + $0x48] sm:$0xff]
        %v458 = vld [vmem:[%s416 + $0x50] sm:$0xff]
        %v459 = vld [vmem:[%s416 + $0x58] sm:$0xff]
        %v460 = vld [vmem:[%s416 + $0x60] sm:$0xff]
        %v461 = vld [vmem:[%s416 + $0x68] sm:$0xff]
        %v462 = vld [vmem:[%s416 + $0x70] sm:$0xff]
        %v463 = vld [vmem:[%s416 + $0x78] sm:$0xff]
        %v464 = vld [vmem:[%s426] sm:$0xff]
        %v465 = vld [vmem:[%s426 + $0x8] sm:$0xff]
        %v466 = vld [vmem:[%s426 + $0x10] sm:$0xff]
        %v467 = vld [vmem:[%s426 + $0x18] sm:$0xff]
        %v468 = vld [vmem:[%s426 + $0x20] sm:$0xff]
        %v469 = vld [vmem:[%s426 + $0x28] sm:$0xff]
        %v470 = vld [vmem:[%s426 + $0x30] sm:$0xff]
        %v471 = vld [vmem:[%s426 + $0x38] sm:$0xff]
        %v472 = vld [vmem:[%s426 + $0x40] sm:$0xff]
        %v473 = vld [vmem:[%s426 + $0x48] sm:$0xff]
        %v474 = vld [vmem:[%s426 + $0x50] sm:$0xff]
        %v475 = vld [vmem:[%s426 + $0x58] sm:$0xff]
        %v476 = vld [vmem:[%s426 + $0x60] sm:$0xff]
        %v477 = vld [vmem:[%s426 + $0x68] sm:$0xff]
        %v478 = vld [vmem:[%s426 + $0x70] sm:$0xff]
        %v479 = vld [vmem:[%s426 + $0x78] sm:$0xff]
        %v480 = vld [vmem:[%s432] sm:$0xff]
        %v481 = vld [vmem:[%s432 + $0x8] sm:$0xff]
        %v482 = vld [vmem:[%s432 + $0x10] sm:$0xff]
        %v483 = vld [vmem:[%s432 + $0x18] sm:$0xff]
        %v484 = vld [vmem:[%s432 + $0x20] sm:$0xff]
        %v485 = vld [vmem:[%s432 + $0x28] sm:$0xff]
        %v486 = vld [vmem:[%s432 + $0x30] sm:$0xff]
        %v487 = vld [vmem:[%s432 + $0x38] sm:$0xff]
        %v488 = vld [vmem:[%s432 + $0x40] sm:$0xff]
        %v489 = vld [vmem:[%s432 + $0x48] sm:$0xff]
        %v490 = vld [vmem:[%s432 + $0x50] sm:$0xff]
        %v491 = vld [vmem:[%s432 + $0x58] sm:$0xff]
        %v492 = vld [vmem:[%s432 + $0x60] sm:$0xff]
        %v493 = vld [vmem:[%s432 + $0x68] sm:$0xff]
        %v494 = vld [vmem:[%s432 + $0x70] sm:$0xff]
        %v495 = vld [vmem:[%s432 + $0x78] sm:$0xff]
        %497 = vset.pattern.permute.xlu0 0
        %498 = vperm.xlu0 %497, %v480
        %v499 = vpop.permute.xlu0 %498
        %502 = vset.pattern.permute.xlu0 0
        %503 = vperm.xlu0 %502, %v481
        %v504 = vpop.permute.xlu0 %503
        %507 = vset.pattern.permute.xlu0 0
        %508 = vperm.xlu0 %507, %v482
        %v509 = vpop.permute.xlu0 %508
        %512 = vset.pattern.permute.xlu0 0
        %513 = vperm.xlu0 %512, %v483
        %v514 = vpop.permute.xlu0 %513
        %517 = vset.pattern.permute.xlu0 0
        %518 = vperm.xlu0 %517, %v484
        %v519 = vpop.permute.xlu0 %518
        %522 = vset.pattern.permute.xlu0 0
        %523 = vperm.xlu0 %522, %v485
        %v524 = vpop.permute.xlu0 %523
        %527 = vset.pattern.permute.xlu0 0
        %528 = vperm.xlu0 %527, %v486
        %v529 = vpop.permute.xlu0 %528
        %532 = vset.pattern.permute.xlu0 0
        %533 = vperm.xlu0 %532, %v487
        %v534 = vpop.permute.xlu0 %533
        %537 = vset.pattern.permute.xlu0 0
        %538 = vperm.xlu0 %537, %v488
        %v539 = vpop.permute.xlu0 %538
        %542 = vset.pattern.permute.xlu0 0
        %543 = vperm.xlu0 %542, %v489
        %v544 = vpop.permute.xlu0 %543
        %547 = vset.pattern.permute.xlu0 0
        %548 = vperm.xlu0 %547, %v490
        %v549 = vpop.permute.xlu0 %548
        %552 = vset.pattern.permute.xlu0 0
        %553 = vperm.xlu0 %552, %v491
        %v554 = vpop.permute.xlu0 %553
        %557 = vset.pattern.permute.xlu0 0
        %558 = vperm.xlu0 %557, %v492
        %v559 = vpop.permute.xlu0 %558
        %562 = vset.pattern.permute.xlu0 0
        %563 = vperm.xlu0 %562, %v493
        %v564 = vpop.permute.xlu0 %563
        %567 = vset.pattern.permute.xlu0 0
        %568 = vperm.xlu0 %567, %v494
        %v569 = vpop.permute.xlu0 %568
        %572 = vset.pattern.permute.xlu0 0
        %573 = vperm.xlu0 %572, %v495
        %v574 = vpop.permute.xlu0 %573
        %v576 = vld [vmem:[%s438] sm:$0xff]
        %v577 = vld [vmem:[%s438 + $0x8] sm:$0xff]
        %v578 = vld [vmem:[%s438 + $0x10] sm:$0xff]
        %v579 = vld [vmem:[%s438 + $0x18] sm:$0xff]
        %v580 = vld [vmem:[%s438 + $0x20] sm:$0xff]
        %v581 = vld [vmem:[%s438 + $0x28] sm:$0xff]
        %v582 = vld [vmem:[%s438 + $0x30] sm:$0xff]
        %v583 = vld [vmem:[%s438 + $0x38] sm:$0xff]
        %v584 = vld [vmem:[%s438 + $0x40] sm:$0xff]
        %v585 = vld [vmem:[%s438 + $0x48] sm:$0xff]
        %v586 = vld [vmem:[%s438 + $0x50] sm:$0xff]
        %v587 = vld [vmem:[%s438 + $0x58] sm:$0xff]
        %v588 = vld [vmem:[%s438 + $0x60] sm:$0xff]
        %v589 = vld [vmem:[%s438 + $0x68] sm:$0xff]
        %v590 = vld [vmem:[%s438 + $0x70] sm:$0xff]
        %v591 = vld [vmem:[%s438 + $0x78] sm:$0xff]
        %593 = vset.pattern.permute.xlu0 0
        %594 = vperm.xlu0 %593, %v576
        %v595 = vpop.permute.xlu0 %594
        %598 = vset.pattern.permute.xlu0 0
        %599 = vperm.xlu0 %598, %v577
        %v600 = vpop.permute.xlu0 %599
        %603 = vset.pattern.permute.xlu0 0
        %604 = vperm.xlu0 %603, %v578
        %v605 = vpop.permute.xlu0 %604
        %608 = vset.pattern.permute.xlu0 0
        %609 = vperm.xlu0 %608, %v579
        %v610 = vpop.permute.xlu0 %609
        %613 = vset.pattern.permute.xlu0 0
        %614 = vperm.xlu0 %613, %v580
        %v615 = vpop.permute.xlu0 %614
        %618 = vset.pattern.permute.xlu0 0
        %619 = vperm.xlu0 %618, %v581
        %v620 = vpop.permute.xlu0 %619
        %623 = vset.pattern.permute.xlu0 0
        %624 = vperm.xlu0 %623, %v582
        %v625 = vpop.permute.xlu0 %624
        %628 = vset.pattern.permute.xlu0 0
        %629 = vperm.xlu0 %628, %v583
        %v630 = vpop.permute.xlu0 %629
        %633 = vset.pattern.permute.xlu0 0
        %634 = vperm.xlu0 %633, %v584
        %v635 = vpop.permute.xlu0 %634
        %638 = vset.pattern.permute.xlu0 0
        %639 = vperm.xlu0 %638, %v585
        %v640 = vpop.permute.xlu0 %639
        %643 = vset.pattern.permute.xlu0 0
        %644 = vperm.xlu0 %643, %v586
        %v645 = vpop.permute.xlu0 %644
        %648 = vset.pattern.permute.xlu0 0
        %649 = vperm.xlu0 %648, %v587
        %v650 = vpop.permute.xlu0 %649
        %653 = vset.pattern.permute.xlu0 0
        %654 = vperm.xlu0 %653, %v588
        %v655 = vpop.permute.xlu0 %654
        %658 = vset.pattern.permute.xlu0 0
        %659 = vperm.xlu0 %658, %v589
        %v660 = vpop.permute.xlu0 %659
        %663 = vset.pattern.permute.xlu0 0
        %664 = vperm.xlu0 %663, %v590
        %v665 = vpop.permute.xlu0 %664
        %668 = vset.pattern.permute.xlu0 0
        %669 = vperm.xlu0 %668, %v591
        %v670 = vpop.permute.xlu0 %669
        %vm672 = vcmp.gt.f32.partialorder %v448, 0.0
        %vm673 = vcmp.gt.f32.partialorder %v449, 0.0
        %vm674 = vcmp.gt.f32.partialorder %v450, 0.0
        %vm675 = vcmp.gt.f32.partialorder %v451, 0.0
        %vm676 = vcmp.gt.f32.partialorder %v452, 0.0
        %vm677 = vcmp.gt.f32.partialorder %v453, 0.0
        %vm678 = vcmp.gt.f32.partialorder %v454, 0.0
        %vm679 = vcmp.gt.f32.partialorder %v455, 0.0
        %vm680 = vcmp.gt.f32.partialorder %v456, 0.0
        %vm681 = vcmp.gt.f32.partialorder %v457, 0.0
        %vm682 = vcmp.gt.f32.partialorder %v458, 0.0
        %vm683 = vcmp.gt.f32.partialorder %v459, 0.0
        %vm684 = vcmp.gt.f32.partialorder %v460, 0.0
        %vm685 = vcmp.gt.f32.partialorder %v461, 0.0
        %vm686 = vcmp.gt.f32.partialorder %v462, 0.0
        %vm687 = vcmp.gt.f32.partialorder %v463, 0.0
        %v688 = vsel %vm672, 1, 0
        %v689 = vsel %vm673, 1, 0
        %v690 = vsel %vm674, 1, 0
        %v691 = vsel %vm675, 1, 0
        %v692 = vsel %vm676, 1, 0
        %v693 = vsel %vm677, 1, 0
        %v694 = vsel %vm678, 1, 0
        %v695 = vsel %vm679, 1, 0
        %v696 = vsel %vm680, 1, 0
        %v697 = vsel %vm681, 1, 0
        %v698 = vsel %vm682, 1, 0
        %v699 = vsel %vm683, 1, 0
        %v700 = vsel %vm684, 1, 0
        %v701 = vsel %vm685, 1, 0
        %v702 = vsel %vm686, 1, 0
        %v703 = vsel %vm687, 1, 0
        %704 = vset.pattern.permute.xlu0 0
        %705 = vperm.xlu0 %704, %v688
        %v706 = vpop.permute.xlu0 %705
        %707 = vset.pattern.permute.xlu0 0
        %708 = vperm.xlu0 %707, %v689
        %v709 = vpop.permute.xlu0 %708
        %710 = vset.pattern.permute.xlu0 0
        %711 = vperm.xlu0 %710, %v690
        %v712 = vpop.permute.xlu0 %711
        %713 = vset.pattern.permute.xlu0 0
        %714 = vperm.xlu0 %713, %v691
        %v715 = vpop.permute.xlu0 %714
        %716 = vset.pattern.permute.xlu0 0
        %717 = vperm.xlu0 %716, %v692
        %v718 = vpop.permute.xlu0 %717
        %719 = vset.pattern.permute.xlu0 0
        %720 = vperm.xlu0 %719, %v693
        %v721 = vpop.permute.xlu0 %720
        %722 = vset.pattern.permute.xlu0 0
        %723 = vperm.xlu0 %722, %v694
        %v724 = vpop.permute.xlu0 %723
        %725 = vset.pattern.permute.xlu0 0
        %726 = vperm.xlu0 %725, %v695
        %v727 = vpop.permute.xlu0 %726
        %728 = vset.pattern.permute.xlu0 0
        %729 = vperm.xlu0 %728, %v696
        %v730 = vpop.permute.xlu0 %729
        %731 = vset.pattern.permute.xlu0 0
        %732 = vperm.xlu0 %731, %v697
        %v733 = vpop.permute.xlu0 %732
        %734 = vset.pattern.permute.xlu0 0
        %735 = vperm.xlu0 %734, %v698
        %v736 = vpop.permute.xlu0 %735
        %737 = vset.pattern.permute.xlu0 0
        %738 = vperm.xlu0 %737, %v699
        %v739 = vpop.permute.xlu0 %738
        %740 = vset.pattern.permute.xlu0 0
        %741 = vperm.xlu0 %740, %v700
        %v742 = vpop.permute.xlu0 %741
        %743 = vset.pattern.permute.xlu0 0
        %744 = vperm.xlu0 %743, %v701
        %v745 = vpop.permute.xlu0 %744
        %746 = vset.pattern.permute.xlu0 0
        %747 = vperm.xlu0 %746, %v702
        %v748 = vpop.permute.xlu0 %747
        %749 = vset.pattern.permute.xlu0 0
        %750 = vperm.xlu0 %749, %v703
        %v751 = vpop.permute.xlu0 %750
        %vm752 = vcmp.eq.s32.totalorder %v706, 1
        %vm753 = vcmp.eq.s32.totalorder %v709, 1
        %vm754 = vcmp.eq.s32.totalorder %v712, 1
        %vm755 = vcmp.eq.s32.totalorder %v715, 1
        %vm756 = vcmp.eq.s32.totalorder %v718, 1
        %vm757 = vcmp.eq.s32.totalorder %v721, 1
        %vm758 = vcmp.eq.s32.totalorder %v724, 1
        %vm759 = vcmp.eq.s32.totalorder %v727, 1
        %vm760 = vcmp.eq.s32.totalorder %v730, 1
        %vm761 = vcmp.eq.s32.totalorder %v733, 1
        %vm762 = vcmp.eq.s32.totalorder %v736, 1
        %vm763 = vcmp.eq.s32.totalorder %v739, 1
        %vm764 = vcmp.eq.s32.totalorder %v742, 1
        %vm765 = vcmp.eq.s32.totalorder %v745, 1
        %vm766 = vcmp.eq.s32.totalorder %v748, 1
        %vm767 = vcmp.eq.s32.totalorder %v751, 1
        %vm768 = vcmp.gt.f32.partialorder %v464, 0.5
        %vm769 = vcmp.gt.f32.partialorder %v465, 0.5
        %vm770 = vcmp.gt.f32.partialorder %v466, 0.5
        %vm771 = vcmp.gt.f32.partialorder %v467, 0.5
        %vm772 = vcmp.gt.f32.partialorder %v468, 0.5
        %vm773 = vcmp.gt.f32.partialorder %v469, 0.5
        %vm774 = vcmp.gt.f32.partialorder %v470, 0.5
        %vm775 = vcmp.gt.f32.partialorder %v471, 0.5
        %vm776 = vcmp.gt.f32.partialorder %v472, 0.5
        %vm777 = vcmp.gt.f32.partialorder %v473, 0.5
        %vm778 = vcmp.gt.f32.partialorder %v474, 0.5
        %vm779 = vcmp.gt.f32.partialorder %v475, 0.5
        %vm780 = vcmp.gt.f32.partialorder %v476, 0.5
        %vm781 = vcmp.gt.f32.partialorder %v477, 0.5
        %vm782 = vcmp.gt.f32.partialorder %v478, 0.5
        %vm783 = vcmp.gt.f32.partialorder %v479, 0.5
        %v784 = vsel %vm768, 1, 0
        %v785 = vsel %vm769, 1, 0
        %v786 = vsel %vm770, 1, 0
        %v787 = vsel %vm771, 1, 0
        %v788 = vsel %vm772, 1, 0
        %v789 = vsel %vm773, 1, 0
        %v790 = vsel %vm774, 1, 0
        %v791 = vsel %vm775, 1, 0
        %v792 = vsel %vm776, 1, 0
        %v793 = vsel %vm777, 1, 0
        %v794 = vsel %vm778, 1, 0
        %v795 = vsel %vm779, 1, 0
        %v796 = vsel %vm780, 1, 0
        %v797 = vsel %vm781, 1, 0
        %v798 = vsel %vm782, 1, 0
        %v799 = vsel %vm783, 1, 0
        %800 = vset.pattern.permute.xlu0 0
        %801 = vperm.xlu0 %800, %v784
        %v802 = vpop.permute.xlu0 %801
        %803 = vset.pattern.permute.xlu0 0
        %804 = vperm.xlu0 %803, %v785
        %v805 = vpop.permute.xlu0 %804
        %806 = vset.pattern.permute.xlu0 0
        %807 = vperm.xlu0 %806, %v786
        %v808 = vpop.permute.xlu0 %807
        %809 = vset.pattern.permute.xlu0 0
        %810 = vperm.xlu0 %809, %v787
        %v811 = vpop.permute.xlu0 %810
        %812 = vset.pattern.permute.xlu0 0
        %813 = vperm.xlu0 %812, %v788
        %v814 = vpop.permute.xlu0 %813
        %815 = vset.pattern.permute.xlu0 0
        %816 = vperm.xlu0 %815, %v789
        %v817 = vpop.permute.xlu0 %816
        %818 = vset.pattern.permute.xlu0 0
        %819 = vperm.xlu0 %818, %v790
        %v820 = vpop.permute.xlu0 %819
        %821 = vset.pattern.permute.xlu0 0
        %822 = vperm.xlu0 %821, %v791
        %v823 = vpop.permute.xlu0 %822
        %824 = vset.pattern.permute.xlu0 0
        %825 = vperm.xlu0 %824, %v792
        %v826 = vpop.permute.xlu0 %825
        %827 = vset.pattern.permute.xlu0 0
        %828 = vperm.xlu0 %827, %v793
        %v829 = vpop.permute.xlu0 %828
        %830 = vset.pattern.permute.xlu0 0
        %831 = vperm.xlu0 %830, %v794
        %v832 = vpop.permute.xlu0 %831
        %833 = vset.pattern.permute.xlu0 0
        %834 = vperm.xlu0 %833, %v795
        %v835 = vpop.permute.xlu0 %834
        %836 = vset.pattern.permute.xlu0 0
        %837 = vperm.xlu0 %836, %v796
        %v838 = vpop.permute.xlu0 %837
        %839 = vset.pattern.permute.xlu0 0
        %840 = vperm.xlu0 %839, %v797
        %v841 = vpop.permute.xlu0 %840
        %842 = vset.pattern.permute.xlu0 0
        %843 = vperm.xlu0 %842, %v798
        %v844 = vpop.permute.xlu0 %843
        %845 = vset.pattern.permute.xlu0 0
        %846 = vperm.xlu0 %845, %v799
        %v847 = vpop.permute.xlu0 %846
        %vm848 = vcmp.eq.s32.totalorder %v802, 1
        %vm849 = vcmp.eq.s32.totalorder %v805, 1
        %vm850 = vcmp.eq.s32.totalorder %v808, 1
        %vm851 = vcmp.eq.s32.totalorder %v811, 1
        %vm852 = vcmp.eq.s32.totalorder %v814, 1
        %vm853 = vcmp.eq.s32.totalorder %v817, 1
        %vm854 = vcmp.eq.s32.totalorder %v820, 1
        %vm855 = vcmp.eq.s32.totalorder %v823, 1
        %vm856 = vcmp.eq.s32.totalorder %v826, 1
        %vm857 = vcmp.eq.s32.totalorder %v829, 1
        %vm858 = vcmp.eq.s32.totalorder %v832, 1
        %vm859 = vcmp.eq.s32.totalorder %v835, 1
        %vm860 = vcmp.eq.s32.totalorder %v838, 1
        %vm861 = vcmp.eq.s32.totalorder %v841, 1
        %vm862 = vcmp.eq.s32.totalorder %v844, 1
        %vm863 = vcmp.eq.s32.totalorder %v847, 1
        %v864 = vld [vmem:[%s6] sm:$0xff]
        %v865 = vld [vmem:[%s7] sm:$0xff]
        %v866 = vld [vmem:[%s443] sm:$0xff]
        %v867 = vld [vmem:[%s447] sm:$0xff]
        %vm868 = vcmp.gt.f32.partialorder %v866, 0.0
        %vm869 = vcmp.gt.f32.partialorder %v867, 0.5
        %v870 = vlaneseq
        %v871 = vshrl.u32 %v870, 7
        %v872 = vsub.s32 0, %v871
        %v873 = vrot.slane %v864, %v872
        %v874 = vsub.f32 %v499, %v873
        %v875 = vsub.f32 %v504, %v873
        %v876 = vsub.f32 %v509, %v873
        %v877 = vsub.f32 %v514, %v873
        %v878 = vsub.f32 %v519, %v873
        %v879 = vsub.f32 %v524, %v873
        %v880 = vsub.f32 %v529, %v873
        %v881 = vsub.f32 %v534, %v873
        %v882 = vsub.f32 %v539, %v873
        %v883 = vsub.f32 %v544, %v873
        %v884 = vsub.f32 %v549, %v873
        %v885 = vsub.f32 %v554, %v873
        %v886 = vsub.f32 %v559, %v873
        %v887 = vsub.f32 %v564, %v873
        %v888 = vsub.f32 %v569, %v873
        %v889 = vsub.f32 %v574, %v873
        %v890 = vlaneseq
        %v891 = vshrl.u32 %v890, 7
        %v892 = vsub.s32 0, %v891
        %v893 = vrot.slane %v865, %v892
        %v894 = vsub.f32 %v595, %v893
        %v895 = vsub.f32 %v600, %v893
        %v896 = vsub.f32 %v605, %v893
        %v897 = vsub.f32 %v610, %v893
        %v898 = vsub.f32 %v615, %v893
        %v899 = vsub.f32 %v620, %v893
        %v900 = vsub.f32 %v625, %v893
        %v901 = vsub.f32 %v630, %v893
        %v902 = vsub.f32 %v635, %v893
        %v903 = vsub.f32 %v640, %v893
        %v904 = vsub.f32 %v645, %v893
        %v905 = vsub.f32 %v650, %v893
        %v906 = vsub.f32 %v655, %v893
        %v907 = vsub.f32 %v660, %v893
        %v908 = vsub.f32 %v665, %v893
        %v909 = vsub.f32 %v670, %v893
        %v910 = vmul.f32 %v874, %v874
        %v911 = vmul.f32 %v875, %v875
        %v912 = vmul.f32 %v876, %v876
        %v913 = vmul.f32 %v877, %v877
        %v914 = vmul.f32 %v878, %v878
        %v915 = vmul.f32 %v879, %v879
        %v916 = vmul.f32 %v880, %v880
        %v917 = vmul.f32 %v881, %v881
        %v918 = vmul.f32 %v882, %v882
        %v919 = vmul.f32 %v883, %v883
        %v920 = vmul.f32 %v884, %v884
        %v921 = vmul.f32 %v885, %v885
        %v922 = vmul.f32 %v886, %v886
        %v923 = vmul.f32 %v887, %v887
        %v924 = vmul.f32 %v888, %v888
        %v925 = vmul.f32 %v889, %v889
        %v926 = vmul.f32 %v894, %v894
        %v927 = vmul.f32 %v895, %v895
        %v928 = vmul.f32 %v896, %v896
        %v929 = vmul.f32 %v897, %v897
        %v930 = vmul.f32 %v898, %v898
        %v931 = vmul.f32 %v899, %v899
        %v932 = vmul.f32 %v900, %v900
        %v933 = vmul.f32 %v901, %v901
        %v934 = vmul.f32 %v902, %v902
        %v935 = vmul.f32 %v903, %v903
        %v936 = vmul.f32 %v904, %v904
        %v937 = vmul.f32 %v905, %v905
        %v938 = vmul.f32 %v906, %v906
        %v939 = vmul.f32 %v907, %v907
        %v940 = vmul.f32 %v908, %v908
        %v941 = vmul.f32 %v909, %v909
        %v942 = vadd.f32 %v910, %v926
        %v943 = vadd.f32 %v911, %v927
        %v944 = vadd.f32 %v912, %v928
        %v945 = vadd.f32 %v913, %v929
        %v946 = vadd.f32 %v914, %v930
        %v947 = vadd.f32 %v915, %v931
        %v948 = vadd.f32 %v916, %v932
        %v949 = vadd.f32 %v917, %v933
        %v950 = vadd.f32 %v918, %v934
        %v951 = vadd.f32 %v919, %v935
        %v952 = vadd.f32 %v920, %v936
        %v953 = vadd.f32 %v921, %v937
        %v954 = vadd.f32 %v922, %v938
        %v955 = vadd.f32 %v923, %v939
        %v956 = vadd.f32 %v924, %v940
        %v957 = vadd.f32 %v925, %v941
        %v958 = vsel %vm868, 1, 0
        %v959 = vlaneseq
        %v960 = vshrl.u32 %v959, 7
        %v961 = vsub.s32 0, %v960
        %v962 = vrot.slane %v958, %v961
        %vm963 = vcmp.eq.s32.totalorder %v962, 1
        %vm964 = vmxor %vm752, %vm963
        %vm965 = vmxor %vm753, %vm963
        %vm966 = vmxor %vm754, %vm963
        %vm967 = vmxor %vm755, %vm963
        %vm968 = vmxor %vm756, %vm963
        %vm969 = vmxor %vm757, %vm963
        %vm970 = vmxor %vm758, %vm963
        %vm971 = vmxor %vm759, %vm963
        %vm972 = vmxor %vm760, %vm963
        %vm973 = vmxor %vm761, %vm963
        %vm974 = vmxor %vm762, %vm963
        %vm975 = vmxor %vm763, %vm963
        %vm976 = vmxor %vm764, %vm963
        %vm977 = vmxor %vm765, %vm963
        %vm978 = vmxor %vm766, %vm963
        %vm979 = vmxor %vm767, %vm963
        %v980 = vmin.f32 %v942, 1e+30
        %v981 = vmin.f32 %v943, 1e+30
        %v982 = vmin.f32 %v944, 1e+30
        %v983 = vmin.f32 %v945, 1e+30
        %v984 = vmin.f32 %v946, 1e+30
        %v985 = vmin.f32 %v947, 1e+30
        %v986 = vmin.f32 %v948, 1e+30
        %v987 = vmin.f32 %v949, 1e+30
        %v988 = vmin.f32 %v950, 1e+30
        %v989 = vmin.f32 %v951, 1e+30
        %v990 = vmin.f32 %v952, 1e+30
        %v991 = vmin.f32 %v953, 1e+30
        %v992 = vmin.f32 %v954, 1e+30
        %v993 = vmin.f32 %v955, 1e+30
        %v994 = vmin.f32 %v956, 1e+30
        %v995 = vmin.f32 %v957, 1e+30
        %v996 = vsel %vm964, %v980, 1e+30
        %v997 = vsel %vm965, %v981, 1e+30
        %v998 = vsel %vm966, %v982, 1e+30
        %v999 = vsel %vm967, %v983, 1e+30
        %v1000 = vsel %vm968, %v984, 1e+30
        %v1001 = vsel %vm969, %v985, 1e+30
        %v1002 = vsel %vm970, %v986, 1e+30
        %v1003 = vsel %vm971, %v987, 1e+30
        %v1004 = vsel %vm972, %v988, 1e+30
        %v1005 = vsel %vm973, %v989, 1e+30
        %v1006 = vsel %vm974, %v990, 1e+30
        %v1007 = vsel %vm975, %v991, 1e+30
        %v1008 = vsel %vm976, %v992, 1e+30
        %v1009 = vsel %vm977, %v993, 1e+30
        %v1010 = vsel %vm978, %v994, 1e+30
        %v1011 = vsel %vm979, %v995, 1e+30
        %v1012 = vsel %vm869, 1, 0
        %v1013 = vlaneseq
        %v1014 = vshrl.u32 %v1013, 7
        %v1015 = vsub.s32 0, %v1014
        %v1016 = vrot.slane %v1012, %v1015
        %vm1017 = vcmp.eq.s32.totalorder %v1016, 1
        %vm1018 = vmxor %vm848, %vm1017
        %vm1019 = vmxor %vm849, %vm1017
        %vm1020 = vmxor %vm850, %vm1017
        %vm1021 = vmxor %vm851, %vm1017
        %vm1022 = vmxor %vm852, %vm1017
        %vm1023 = vmxor %vm853, %vm1017
        %vm1024 = vmxor %vm854, %vm1017
        %vm1025 = vmxor %vm855, %vm1017
        %vm1026 = vmxor %vm856, %vm1017
        %vm1027 = vmxor %vm857, %vm1017
        %vm1028 = vmxor %vm858, %vm1017
        %vm1029 = vmxor %vm859, %vm1017
        %vm1030 = vmxor %vm860, %vm1017
        %vm1031 = vmxor %vm861, %vm1017
        %vm1032 = vmxor %vm862, %vm1017
        %vm1033 = vmxor %vm863, %vm1017
        %v1034 = vsel %vm1018, %v980, 1e+30
        %v1035 = vsel %vm1019, %v981, 1e+30
        %v1036 = vsel %vm1020, %v982, 1e+30
        %v1037 = vsel %vm1021, %v983, 1e+30
        %v1038 = vsel %vm1022, %v984, 1e+30
        %v1039 = vsel %vm1023, %v985, 1e+30
        %v1040 = vsel %vm1024, %v986, 1e+30
        %v1041 = vsel %vm1025, %v987, 1e+30
        %v1042 = vsel %vm1026, %v988, 1e+30
        %v1043 = vsel %vm1027, %v989, 1e+30
        %v1044 = vsel %vm1028, %v990, 1e+30
        %v1045 = vsel %vm1029, %v991, 1e+30
        %v1046 = vsel %vm1030, %v992, 1e+30
        %v1047 = vsel %vm1031, %v993, 1e+30
        %v1048 = vsel %vm1032, %v994, 1e+30
        %v1049 = vsel %vm1033, %v995, 1e+30
        %v1050 = vlaneseq
        %v1051 = vshrl.u32 %v1050, 7
        %v1052 = vsub.s32 1, %v1051
        %v1053 = vrot.slane %v864, %v1052
        %v1054 = vsub.f32 %v499, %v1053
        %v1055 = vsub.f32 %v504, %v1053
        %v1056 = vsub.f32 %v509, %v1053
        %v1057 = vsub.f32 %v514, %v1053
        %v1058 = vsub.f32 %v519, %v1053
        %v1059 = vsub.f32 %v524, %v1053
        %v1060 = vsub.f32 %v529, %v1053
        %v1061 = vsub.f32 %v534, %v1053
        %v1062 = vsub.f32 %v539, %v1053
        %v1063 = vsub.f32 %v544, %v1053
        %v1064 = vsub.f32 %v549, %v1053
        %v1065 = vsub.f32 %v554, %v1053
        %v1066 = vsub.f32 %v559, %v1053
        %v1067 = vsub.f32 %v564, %v1053
        %v1068 = vsub.f32 %v569, %v1053
        %v1069 = vsub.f32 %v574, %v1053
        %v1070 = vlaneseq
        %v1071 = vshrl.u32 %v1070, 7
        %v1072 = vsub.s32 1, %v1071
        %v1073 = vrot.slane %v865, %v1072
        %v1074 = vsub.f32 %v595, %v1073
        %v1075 = vsub.f32 %v600, %v1073
        %v1076 = vsub.f32 %v605, %v1073
        %v1077 = vsub.f32 %v610, %v1073
        %v1078 = vsub.f32 %v615, %v1073
        %v1079 = vsub.f32 %v620, %v1073
        %v1080 = vsub.f32 %v625, %v1073
        %v1081 = vsub.f32 %v630, %v1073
        %v1082 = vsub.f32 %v635, %v1073
        %v1083 = vsub.f32 %v640, %v1073
        %v1084 = vsub.f32 %v645, %v1073
        %v1085 = vsub.f32 %v650, %v1073
        %v1086 = vsub.f32 %v655, %v1073
        %v1087 = vsub.f32 %v660, %v1073
        %v1088 = vsub.f32 %v665, %v1073
        %v1089 = vsub.f32 %v670, %v1073
        %v1090 = vmul.f32 %v1054, %v1054
        %v1091 = vmul.f32 %v1055, %v1055
        %v1092 = vmul.f32 %v1056, %v1056
        %v1093 = vmul.f32 %v1057, %v1057
        %v1094 = vmul.f32 %v1058, %v1058
        %v1095 = vmul.f32 %v1059, %v1059
        %v1096 = vmul.f32 %v1060, %v1060
        %v1097 = vmul.f32 %v1061, %v1061
        %v1098 = vmul.f32 %v1062, %v1062
        %v1099 = vmul.f32 %v1063, %v1063
        %v1100 = vmul.f32 %v1064, %v1064
        %v1101 = vmul.f32 %v1065, %v1065
        %v1102 = vmul.f32 %v1066, %v1066
        %v1103 = vmul.f32 %v1067, %v1067
        %v1104 = vmul.f32 %v1068, %v1068
        %v1105 = vmul.f32 %v1069, %v1069
        %v1106 = vmul.f32 %v1074, %v1074
        %v1107 = vmul.f32 %v1075, %v1075
        %v1108 = vmul.f32 %v1076, %v1076
        %v1109 = vmul.f32 %v1077, %v1077
        %v1110 = vmul.f32 %v1078, %v1078
        %v1111 = vmul.f32 %v1079, %v1079
        %v1112 = vmul.f32 %v1080, %v1080
        %v1113 = vmul.f32 %v1081, %v1081
        %v1114 = vmul.f32 %v1082, %v1082
        %v1115 = vmul.f32 %v1083, %v1083
        %v1116 = vmul.f32 %v1084, %v1084
        %v1117 = vmul.f32 %v1085, %v1085
        %v1118 = vmul.f32 %v1086, %v1086
        %v1119 = vmul.f32 %v1087, %v1087
        %v1120 = vmul.f32 %v1088, %v1088
        %v1121 = vmul.f32 %v1089, %v1089
        %v1122 = vadd.f32 %v1090, %v1106
        %v1123 = vadd.f32 %v1091, %v1107
        %v1124 = vadd.f32 %v1092, %v1108
        %v1125 = vadd.f32 %v1093, %v1109
        %v1126 = vadd.f32 %v1094, %v1110
        %v1127 = vadd.f32 %v1095, %v1111
        %v1128 = vadd.f32 %v1096, %v1112
        %v1129 = vadd.f32 %v1097, %v1113
        %v1130 = vadd.f32 %v1098, %v1114
        %v1131 = vadd.f32 %v1099, %v1115
        %v1132 = vadd.f32 %v1100, %v1116
        %v1133 = vadd.f32 %v1101, %v1117
        %v1134 = vadd.f32 %v1102, %v1118
        %v1135 = vadd.f32 %v1103, %v1119
        %v1136 = vadd.f32 %v1104, %v1120
        %v1137 = vadd.f32 %v1105, %v1121
        %v1138 = vlaneseq
        %v1139 = vshrl.u32 %v1138, 7
        %v1140 = vsub.s32 1, %v1139
        %v1141 = vrot.slane %v958, %v1140
        %vm1142 = vcmp.eq.s32.totalorder %v1141, 1
        %vm1143 = vmxor %vm752, %vm1142
        %vm1144 = vmxor %vm753, %vm1142
        %vm1145 = vmxor %vm754, %vm1142
        %vm1146 = vmxor %vm755, %vm1142
        %vm1147 = vmxor %vm756, %vm1142
        %vm1148 = vmxor %vm757, %vm1142
        %vm1149 = vmxor %vm758, %vm1142
        %vm1150 = vmxor %vm759, %vm1142
        %vm1151 = vmxor %vm760, %vm1142
        %vm1152 = vmxor %vm761, %vm1142
        %vm1153 = vmxor %vm762, %vm1142
        %vm1154 = vmxor %vm763, %vm1142
        %vm1155 = vmxor %vm764, %vm1142
        %vm1156 = vmxor %vm765, %vm1142
        %vm1157 = vmxor %vm766, %vm1142
        %vm1158 = vmxor %vm767, %vm1142
        %v1159 = vmin.f32 %v996, %v1122
        %v1160 = vmin.f32 %v997, %v1123
        %v1161 = vmin.f32 %v998, %v1124
        %v1162 = vmin.f32 %v999, %v1125
        %v1163 = vmin.f32 %v1000, %v1126
        %v1164 = vmin.f32 %v1001, %v1127
        %v1165 = vmin.f32 %v1002, %v1128
        %v1166 = vmin.f32 %v1003, %v1129
        %v1167 = vmin.f32 %v1004, %v1130
        %v1168 = vmin.f32 %v1005, %v1131
        %v1169 = vmin.f32 %v1006, %v1132
        %v1170 = vmin.f32 %v1007, %v1133
        %v1171 = vmin.f32 %v1008, %v1134
        %v1172 = vmin.f32 %v1009, %v1135
        %v1173 = vmin.f32 %v1010, %v1136
        %v1174 = vmin.f32 %v1011, %v1137
        %v1175 = vsel %vm1143, %v1159, %v996
        %v1176 = vsel %vm1144, %v1160, %v997
        %v1177 = vsel %vm1145, %v1161, %v998
        %v1178 = vsel %vm1146, %v1162, %v999
        %v1179 = vsel %vm1147, %v1163, %v1000
        %v1180 = vsel %vm1148, %v1164, %v1001
        %v1181 = vsel %vm1149, %v1165, %v1002
        %v1182 = vsel %vm1150, %v1166, %v1003
        %v1183 = vsel %vm1151, %v1167, %v1004
        %v1184 = vsel %vm1152, %v1168, %v1005
        %v1185 = vsel %vm1153, %v1169, %v1006
        %v1186 = vsel %vm1154, %v1170, %v1007
        %v1187 = vsel %vm1155, %v1171, %v1008
        %v1188 = vsel %vm1156, %v1172, %v1009
        %v1189 = vsel %vm1157, %v1173, %v1010
        %v1190 = vsel %vm1158, %v1174, %v1011
        %v1191 = vlaneseq
        %v1192 = vshrl.u32 %v1191, 7
        %v1193 = vsub.s32 1, %v1192
        %v1194 = vrot.slane %v1012, %v1193
        %vm1195 = vcmp.eq.s32.totalorder %v1194, 1
        %vm1196 = vmxor %vm848, %vm1195
        %vm1197 = vmxor %vm849, %vm1195
        %vm1198 = vmxor %vm850, %vm1195
        %vm1199 = vmxor %vm851, %vm1195
        %vm1200 = vmxor %vm852, %vm1195
        %vm1201 = vmxor %vm853, %vm1195
        %vm1202 = vmxor %vm854, %vm1195
        %vm1203 = vmxor %vm855, %vm1195
        %vm1204 = vmxor %vm856, %vm1195
        %vm1205 = vmxor %vm857, %vm1195
        %vm1206 = vmxor %vm858, %vm1195
        %vm1207 = vmxor %vm859, %vm1195
        %vm1208 = vmxor %vm860, %vm1195
        %vm1209 = vmxor %vm861, %vm1195
        %vm1210 = vmxor %vm862, %vm1195
        %vm1211 = vmxor %vm863, %vm1195
        %v1212 = vmin.f32 %v1034, %v1122
        %v1213 = vmin.f32 %v1035, %v1123
        %v1214 = vmin.f32 %v1036, %v1124
        %v1215 = vmin.f32 %v1037, %v1125
        %v1216 = vmin.f32 %v1038, %v1126
        %v1217 = vmin.f32 %v1039, %v1127
        %v1218 = vmin.f32 %v1040, %v1128
        %v1219 = vmin.f32 %v1041, %v1129
        %v1220 = vmin.f32 %v1042, %v1130
        %v1221 = vmin.f32 %v1043, %v1131
        %v1222 = vmin.f32 %v1044, %v1132
        %v1223 = vmin.f32 %v1045, %v1133
        %v1224 = vmin.f32 %v1046, %v1134
        %v1225 = vmin.f32 %v1047, %v1135
        %v1226 = vmin.f32 %v1048, %v1136
        %v1227 = vmin.f32 %v1049, %v1137
        %v1228 = vsel %vm1196, %v1212, %v1034
        %v1229 = vsel %vm1197, %v1213, %v1035
        %v1230 = vsel %vm1198, %v1214, %v1036
        %v1231 = vsel %vm1199, %v1215, %v1037
        %v1232 = vsel %vm1200, %v1216, %v1038
        %v1233 = vsel %vm1201, %v1217, %v1039
        %v1234 = vsel %vm1202, %v1218, %v1040
        %v1235 = vsel %vm1203, %v1219, %v1041
        %v1236 = vsel %vm1204, %v1220, %v1042
        %v1237 = vsel %vm1205, %v1221, %v1043
        %v1238 = vsel %vm1206, %v1222, %v1044
        %v1239 = vsel %vm1207, %v1223, %v1045
        %v1240 = vsel %vm1208, %v1224, %v1046
        %v1241 = vsel %vm1209, %v1225, %v1047
        %v1242 = vsel %vm1210, %v1226, %v1048
        %v1243 = vsel %vm1211, %v1227, %v1049
        %v1244 = vlaneseq
        %v1245 = vshrl.u32 %v1244, 7
        %v1246 = vsub.s32 2, %v1245
        %v1247 = vrot.slane %v864, %v1246
        %v1248 = vsub.f32 %v499, %v1247
        %v1249 = vsub.f32 %v504, %v1247
        %v1250 = vsub.f32 %v509, %v1247
        %v1251 = vsub.f32 %v514, %v1247
        %v1252 = vsub.f32 %v519, %v1247
        %v1253 = vsub.f32 %v524, %v1247
        %v1254 = vsub.f32 %v529, %v1247
        %v1255 = vsub.f32 %v534, %v1247
        %v1256 = vsub.f32 %v539, %v1247
        %v1257 = vsub.f32 %v544, %v1247
        %v1258 = vsub.f32 %v549, %v1247
        %v1259 = vsub.f32 %v554, %v1247
        %v1260 = vsub.f32 %v559, %v1247
        %v1261 = vsub.f32 %v564, %v1247
        %v1262 = vsub.f32 %v569, %v1247
        %v1263 = vsub.f32 %v574, %v1247
        %v1264 = vlaneseq
        %v1265 = vshrl.u32 %v1264, 7
        %v1266 = vsub.s32 2, %v1265
        %v1267 = vrot.slane %v865, %v1266
        %v1268 = vsub.f32 %v595, %v1267
        %v1269 = vsub.f32 %v600, %v1267
        %v1270 = vsub.f32 %v605, %v1267
        %v1271 = vsub.f32 %v610, %v1267
        %v1272 = vsub.f32 %v615, %v1267
        %v1273 = vsub.f32 %v620, %v1267
        %v1274 = vsub.f32 %v625, %v1267
        %v1275 = vsub.f32 %v630, %v1267
        %v1276 = vsub.f32 %v635, %v1267
        %v1277 = vsub.f32 %v640, %v1267
        %v1278 = vsub.f32 %v645, %v1267
        %v1279 = vsub.f32 %v650, %v1267
        %v1280 = vsub.f32 %v655, %v1267
        %v1281 = vsub.f32 %v660, %v1267
        %v1282 = vsub.f32 %v665, %v1267
        %v1283 = vsub.f32 %v670, %v1267
        %v1284 = vmul.f32 %v1248, %v1248
        %v1285 = vmul.f32 %v1249, %v1249
        %v1286 = vmul.f32 %v1250, %v1250
        %v1287 = vmul.f32 %v1251, %v1251
        %v1288 = vmul.f32 %v1252, %v1252
        %v1289 = vmul.f32 %v1253, %v1253
        %v1290 = vmul.f32 %v1254, %v1254
        %v1291 = vmul.f32 %v1255, %v1255
        %v1292 = vmul.f32 %v1256, %v1256
        %v1293 = vmul.f32 %v1257, %v1257
        %v1294 = vmul.f32 %v1258, %v1258
        %v1295 = vmul.f32 %v1259, %v1259
        %v1296 = vmul.f32 %v1260, %v1260
        %v1297 = vmul.f32 %v1261, %v1261
        %v1298 = vmul.f32 %v1262, %v1262
        %v1299 = vmul.f32 %v1263, %v1263
        %v1300 = vmul.f32 %v1268, %v1268
        %v1301 = vmul.f32 %v1269, %v1269
        %v1302 = vmul.f32 %v1270, %v1270
        %v1303 = vmul.f32 %v1271, %v1271
        %v1304 = vmul.f32 %v1272, %v1272
        %v1305 = vmul.f32 %v1273, %v1273
        %v1306 = vmul.f32 %v1274, %v1274
        %v1307 = vmul.f32 %v1275, %v1275
        %v1308 = vmul.f32 %v1276, %v1276
        %v1309 = vmul.f32 %v1277, %v1277
        %v1310 = vmul.f32 %v1278, %v1278
        %v1311 = vmul.f32 %v1279, %v1279
        %v1312 = vmul.f32 %v1280, %v1280
        %v1313 = vmul.f32 %v1281, %v1281
        %v1314 = vmul.f32 %v1282, %v1282
        %v1315 = vmul.f32 %v1283, %v1283
        %v1316 = vadd.f32 %v1284, %v1300
        %v1317 = vadd.f32 %v1285, %v1301
        %v1318 = vadd.f32 %v1286, %v1302
        %v1319 = vadd.f32 %v1287, %v1303
        %v1320 = vadd.f32 %v1288, %v1304
        %v1321 = vadd.f32 %v1289, %v1305
        %v1322 = vadd.f32 %v1290, %v1306
        %v1323 = vadd.f32 %v1291, %v1307
        %v1324 = vadd.f32 %v1292, %v1308
        %v1325 = vadd.f32 %v1293, %v1309
        %v1326 = vadd.f32 %v1294, %v1310
        %v1327 = vadd.f32 %v1295, %v1311
        %v1328 = vadd.f32 %v1296, %v1312
        %v1329 = vadd.f32 %v1297, %v1313
        %v1330 = vadd.f32 %v1298, %v1314
        %v1331 = vadd.f32 %v1299, %v1315
        %v1332 = vlaneseq
        %v1333 = vshrl.u32 %v1332, 7
        %v1334 = vsub.s32 2, %v1333
        %v1335 = vrot.slane %v958, %v1334
        %vm1336 = vcmp.eq.s32.totalorder %v1335, 1
        %vm1337 = vmxor %vm752, %vm1336
        %vm1338 = vmxor %vm753, %vm1336
        %vm1339 = vmxor %vm754, %vm1336
        %vm1340 = vmxor %vm755, %vm1336
        %vm1341 = vmxor %vm756, %vm1336
        %vm1342 = vmxor %vm757, %vm1336
        %vm1343 = vmxor %vm758, %vm1336
        %vm1344 = vmxor %vm759, %vm1336
        %vm1345 = vmxor %vm760, %vm1336
        %vm1346 = vmxor %vm761, %vm1336
        %vm1347 = vmxor %vm762, %vm1336
        %vm1348 = vmxor %vm763, %vm1336
        %vm1349 = vmxor %vm764, %vm1336
        %vm1350 = vmxor %vm765, %vm1336
        %vm1351 = vmxor %vm766, %vm1336
        %vm1352 = vmxor %vm767, %vm1336
        %v1353 = vmin.f32 %v1175, %v1316
        %v1354 = vmin.f32 %v1176, %v1317
        %v1355 = vmin.f32 %v1177, %v1318
        %v1356 = vmin.f32 %v1178, %v1319
        %v1357 = vmin.f32 %v1179, %v1320
        %v1358 = vmin.f32 %v1180, %v1321
        %v1359 = vmin.f32 %v1181, %v1322
        %v1360 = vmin.f32 %v1182, %v1323
        %v1361 = vmin.f32 %v1183, %v1324
        %v1362 = vmin.f32 %v1184, %v1325
        %v1363 = vmin.f32 %v1185, %v1326
        %v1364 = vmin.f32 %v1186, %v1327
        %v1365 = vmin.f32 %v1187, %v1328
        %v1366 = vmin.f32 %v1188, %v1329
        %v1367 = vmin.f32 %v1189, %v1330
        %v1368 = vmin.f32 %v1190, %v1331
        %v1369 = vsel %vm1337, %v1353, %v1175
        %v1370 = vsel %vm1338, %v1354, %v1176
        %v1371 = vsel %vm1339, %v1355, %v1177
        %v1372 = vsel %vm1340, %v1356, %v1178
        %v1373 = vsel %vm1341, %v1357, %v1179
        %v1374 = vsel %vm1342, %v1358, %v1180
        %v1375 = vsel %vm1343, %v1359, %v1181
        %v1376 = vsel %vm1344, %v1360, %v1182
        %v1377 = vsel %vm1345, %v1361, %v1183
        %v1378 = vsel %vm1346, %v1362, %v1184
        %v1379 = vsel %vm1347, %v1363, %v1185
        %v1380 = vsel %vm1348, %v1364, %v1186
        %v1381 = vsel %vm1349, %v1365, %v1187
        %v1382 = vsel %vm1350, %v1366, %v1188
        %v1383 = vsel %vm1351, %v1367, %v1189
        %v1384 = vsel %vm1352, %v1368, %v1190
        %v1385 = vlaneseq
        %v1386 = vshrl.u32 %v1385, 7
        %v1387 = vsub.s32 2, %v1386
        %v1388 = vrot.slane %v1012, %v1387
        %vm1389 = vcmp.eq.s32.totalorder %v1388, 1
        %vm1390 = vmxor %vm848, %vm1389
        %vm1391 = vmxor %vm849, %vm1389
        %vm1392 = vmxor %vm850, %vm1389
        %vm1393 = vmxor %vm851, %vm1389
        %vm1394 = vmxor %vm852, %vm1389
        %vm1395 = vmxor %vm853, %vm1389
        %vm1396 = vmxor %vm854, %vm1389
        %vm1397 = vmxor %vm855, %vm1389
        %vm1398 = vmxor %vm856, %vm1389
        %vm1399 = vmxor %vm857, %vm1389
        %vm1400 = vmxor %vm858, %vm1389
        %vm1401 = vmxor %vm859, %vm1389
        %vm1402 = vmxor %vm860, %vm1389
        %vm1403 = vmxor %vm861, %vm1389
        %vm1404 = vmxor %vm862, %vm1389
        %vm1405 = vmxor %vm863, %vm1389
        %v1406 = vmin.f32 %v1228, %v1316
        %v1407 = vmin.f32 %v1229, %v1317
        %v1408 = vmin.f32 %v1230, %v1318
        %v1409 = vmin.f32 %v1231, %v1319
        %v1410 = vmin.f32 %v1232, %v1320
        %v1411 = vmin.f32 %v1233, %v1321
        %v1412 = vmin.f32 %v1234, %v1322
        %v1413 = vmin.f32 %v1235, %v1323
        %v1414 = vmin.f32 %v1236, %v1324
        %v1415 = vmin.f32 %v1237, %v1325
        %v1416 = vmin.f32 %v1238, %v1326
        %v1417 = vmin.f32 %v1239, %v1327
        %v1418 = vmin.f32 %v1240, %v1328
        %v1419 = vmin.f32 %v1241, %v1329
        %v1420 = vmin.f32 %v1242, %v1330
        %v1421 = vmin.f32 %v1243, %v1331
        %v1422 = vsel %vm1390, %v1406, %v1228
        %v1423 = vsel %vm1391, %v1407, %v1229
        %v1424 = vsel %vm1392, %v1408, %v1230
        %v1425 = vsel %vm1393, %v1409, %v1231
        %v1426 = vsel %vm1394, %v1410, %v1232
        %v1427 = vsel %vm1395, %v1411, %v1233
        %v1428 = vsel %vm1396, %v1412, %v1234
        %v1429 = vsel %vm1397, %v1413, %v1235
        %v1430 = vsel %vm1398, %v1414, %v1236
        %v1431 = vsel %vm1399, %v1415, %v1237
        %v1432 = vsel %vm1400, %v1416, %v1238
        %v1433 = vsel %vm1401, %v1417, %v1239
        %v1434 = vsel %vm1402, %v1418, %v1240
        %v1435 = vsel %vm1403, %v1419, %v1241
        %v1436 = vsel %vm1404, %v1420, %v1242
        %v1437 = vsel %vm1405, %v1421, %v1243
        %v1438 = vlaneseq
        %v1439 = vshrl.u32 %v1438, 7
        %v1440 = vsub.s32 3, %v1439
        %v1441 = vrot.slane %v864, %v1440
        %v1442 = vsub.f32 %v499, %v1441
        %v1443 = vsub.f32 %v504, %v1441
        %v1444 = vsub.f32 %v509, %v1441
        %v1445 = vsub.f32 %v514, %v1441
        %v1446 = vsub.f32 %v519, %v1441
        %v1447 = vsub.f32 %v524, %v1441
        %v1448 = vsub.f32 %v529, %v1441
        %v1449 = vsub.f32 %v534, %v1441
        %v1450 = vsub.f32 %v539, %v1441
        %v1451 = vsub.f32 %v544, %v1441
        %v1452 = vsub.f32 %v549, %v1441
        %v1453 = vsub.f32 %v554, %v1441
        %v1454 = vsub.f32 %v559, %v1441
        %v1455 = vsub.f32 %v564, %v1441
        %v1456 = vsub.f32 %v569, %v1441
        %v1457 = vsub.f32 %v574, %v1441
        %v1458 = vlaneseq
        %v1459 = vshrl.u32 %v1458, 7
        %v1460 = vsub.s32 3, %v1459
        %v1461 = vrot.slane %v865, %v1460
        %v1462 = vsub.f32 %v595, %v1461
        %v1463 = vsub.f32 %v600, %v1461
        %v1464 = vsub.f32 %v605, %v1461
        %v1465 = vsub.f32 %v610, %v1461
        %v1466 = vsub.f32 %v615, %v1461
        %v1467 = vsub.f32 %v620, %v1461
        %v1468 = vsub.f32 %v625, %v1461
        %v1469 = vsub.f32 %v630, %v1461
        %v1470 = vsub.f32 %v635, %v1461
        %v1471 = vsub.f32 %v640, %v1461
        %v1472 = vsub.f32 %v645, %v1461
        %v1473 = vsub.f32 %v650, %v1461
        %v1474 = vsub.f32 %v655, %v1461
        %v1475 = vsub.f32 %v660, %v1461
        %v1476 = vsub.f32 %v665, %v1461
        %v1477 = vsub.f32 %v670, %v1461
        %v1478 = vmul.f32 %v1442, %v1442
        %v1479 = vmul.f32 %v1443, %v1443
        %v1480 = vmul.f32 %v1444, %v1444
        %v1481 = vmul.f32 %v1445, %v1445
        %v1482 = vmul.f32 %v1446, %v1446
        %v1483 = vmul.f32 %v1447, %v1447
        %v1484 = vmul.f32 %v1448, %v1448
        %v1485 = vmul.f32 %v1449, %v1449
        %v1486 = vmul.f32 %v1450, %v1450
        %v1487 = vmul.f32 %v1451, %v1451
        %v1488 = vmul.f32 %v1452, %v1452
        %v1489 = vmul.f32 %v1453, %v1453
        %v1490 = vmul.f32 %v1454, %v1454
        %v1491 = vmul.f32 %v1455, %v1455
        %v1492 = vmul.f32 %v1456, %v1456
        %v1493 = vmul.f32 %v1457, %v1457
        %v1494 = vmul.f32 %v1462, %v1462
        %v1495 = vmul.f32 %v1463, %v1463
        %v1496 = vmul.f32 %v1464, %v1464
        %v1497 = vmul.f32 %v1465, %v1465
        %v1498 = vmul.f32 %v1466, %v1466
        %v1499 = vmul.f32 %v1467, %v1467
        %v1500 = vmul.f32 %v1468, %v1468
        %v1501 = vmul.f32 %v1469, %v1469
        %v1502 = vmul.f32 %v1470, %v1470
        %v1503 = vmul.f32 %v1471, %v1471
        %v1504 = vmul.f32 %v1472, %v1472
        %v1505 = vmul.f32 %v1473, %v1473
        %v1506 = vmul.f32 %v1474, %v1474
        %v1507 = vmul.f32 %v1475, %v1475
        %v1508 = vmul.f32 %v1476, %v1476
        %v1509 = vmul.f32 %v1477, %v1477
        %v1510 = vadd.f32 %v1478, %v1494
        %v1511 = vadd.f32 %v1479, %v1495
        %v1512 = vadd.f32 %v1480, %v1496
        %v1513 = vadd.f32 %v1481, %v1497
        %v1514 = vadd.f32 %v1482, %v1498
        %v1515 = vadd.f32 %v1483, %v1499
        %v1516 = vadd.f32 %v1484, %v1500
        %v1517 = vadd.f32 %v1485, %v1501
        %v1518 = vadd.f32 %v1486, %v1502
        %v1519 = vadd.f32 %v1487, %v1503
        %v1520 = vadd.f32 %v1488, %v1504
        %v1521 = vadd.f32 %v1489, %v1505
        %v1522 = vadd.f32 %v1490, %v1506
        %v1523 = vadd.f32 %v1491, %v1507
        %v1524 = vadd.f32 %v1492, %v1508
        %v1525 = vadd.f32 %v1493, %v1509
        %v1526 = vlaneseq
        %v1527 = vshrl.u32 %v1526, 7
        %v1528 = vsub.s32 3, %v1527
        %v1529 = vrot.slane %v958, %v1528
        %vm1530 = vcmp.eq.s32.totalorder %v1529, 1
        %vm1531 = vmxor %vm752, %vm1530
        %vm1532 = vmxor %vm753, %vm1530
        %vm1533 = vmxor %vm754, %vm1530
        %vm1534 = vmxor %vm755, %vm1530
        %vm1535 = vmxor %vm756, %vm1530
        %vm1536 = vmxor %vm757, %vm1530
        %vm1537 = vmxor %vm758, %vm1530
        %vm1538 = vmxor %vm759, %vm1530
        %vm1539 = vmxor %vm760, %vm1530
        %vm1540 = vmxor %vm761, %vm1530
        %vm1541 = vmxor %vm762, %vm1530
        %vm1542 = vmxor %vm763, %vm1530
        %vm1543 = vmxor %vm764, %vm1530
        %vm1544 = vmxor %vm765, %vm1530
        %vm1545 = vmxor %vm766, %vm1530
        %vm1546 = vmxor %vm767, %vm1530
        %v1547 = vmin.f32 %v1369, %v1510
        %v1548 = vmin.f32 %v1370, %v1511
        %v1549 = vmin.f32 %v1371, %v1512
        %v1550 = vmin.f32 %v1372, %v1513
        %v1551 = vmin.f32 %v1373, %v1514
        %v1552 = vmin.f32 %v1374, %v1515
        %v1553 = vmin.f32 %v1375, %v1516
        %v1554 = vmin.f32 %v1376, %v1517
        %v1555 = vmin.f32 %v1377, %v1518
        %v1556 = vmin.f32 %v1378, %v1519
        %v1557 = vmin.f32 %v1379, %v1520
        %v1558 = vmin.f32 %v1380, %v1521
        %v1559 = vmin.f32 %v1381, %v1522
        %v1560 = vmin.f32 %v1382, %v1523
        %v1561 = vmin.f32 %v1383, %v1524
        %v1562 = vmin.f32 %v1384, %v1525
        %v1563 = vsel %vm1531, %v1547, %v1369
        %v1564 = vsel %vm1532, %v1548, %v1370
        %v1565 = vsel %vm1533, %v1549, %v1371
        %v1566 = vsel %vm1534, %v1550, %v1372
        %v1567 = vsel %vm1535, %v1551, %v1373
        %v1568 = vsel %vm1536, %v1552, %v1374
        %v1569 = vsel %vm1537, %v1553, %v1375
        %v1570 = vsel %vm1538, %v1554, %v1376
        %v1571 = vsel %vm1539, %v1555, %v1377
        %v1572 = vsel %vm1540, %v1556, %v1378
        %v1573 = vsel %vm1541, %v1557, %v1379
        %v1574 = vsel %vm1542, %v1558, %v1380
        %v1575 = vsel %vm1543, %v1559, %v1381
        %v1576 = vsel %vm1544, %v1560, %v1382
        %v1577 = vsel %vm1545, %v1561, %v1383
        %v1578 = vsel %vm1546, %v1562, %v1384
        %v1579 = vlaneseq
        %v1580 = vshrl.u32 %v1579, 7
        %v1581 = vsub.s32 3, %v1580
        %v1582 = vrot.slane %v1012, %v1581
        %vm1583 = vcmp.eq.s32.totalorder %v1582, 1
        %vm1584 = vmxor %vm848, %vm1583
        %vm1585 = vmxor %vm849, %vm1583
        %vm1586 = vmxor %vm850, %vm1583
        %vm1587 = vmxor %vm851, %vm1583
        %vm1588 = vmxor %vm852, %vm1583
        %vm1589 = vmxor %vm853, %vm1583
        %vm1590 = vmxor %vm854, %vm1583
        %vm1591 = vmxor %vm855, %vm1583
        %vm1592 = vmxor %vm856, %vm1583
        %vm1593 = vmxor %vm857, %vm1583
        %vm1594 = vmxor %vm858, %vm1583
        %vm1595 = vmxor %vm859, %vm1583
        %vm1596 = vmxor %vm860, %vm1583
        %vm1597 = vmxor %vm861, %vm1583
        %vm1598 = vmxor %vm862, %vm1583
        %vm1599 = vmxor %vm863, %vm1583
        %v1600 = vmin.f32 %v1422, %v1510
        %v1601 = vmin.f32 %v1423, %v1511
        %v1602 = vmin.f32 %v1424, %v1512
        %v1603 = vmin.f32 %v1425, %v1513
        %v1604 = vmin.f32 %v1426, %v1514
        %v1605 = vmin.f32 %v1427, %v1515
        %v1606 = vmin.f32 %v1428, %v1516
        %v1607 = vmin.f32 %v1429, %v1517
        %v1608 = vmin.f32 %v1430, %v1518
        %v1609 = vmin.f32 %v1431, %v1519
        %v1610 = vmin.f32 %v1432, %v1520
        %v1611 = vmin.f32 %v1433, %v1521
        %v1612 = vmin.f32 %v1434, %v1522
        %v1613 = vmin.f32 %v1435, %v1523
        %v1614 = vmin.f32 %v1436, %v1524
        %v1615 = vmin.f32 %v1437, %v1525
        %v1616 = vsel %vm1584, %v1600, %v1422
        %v1617 = vsel %vm1585, %v1601, %v1423
        %v1618 = vsel %vm1586, %v1602, %v1424
        %v1619 = vsel %vm1587, %v1603, %v1425
        %v1620 = vsel %vm1588, %v1604, %v1426
        %v1621 = vsel %vm1589, %v1605, %v1427
        %v1622 = vsel %vm1590, %v1606, %v1428
        %v1623 = vsel %vm1591, %v1607, %v1429
        %v1624 = vsel %vm1592, %v1608, %v1430
        %v1625 = vsel %vm1593, %v1609, %v1431
        %v1626 = vsel %vm1594, %v1610, %v1432
        %v1627 = vsel %vm1595, %v1611, %v1433
        %v1628 = vsel %vm1596, %v1612, %v1434
        %v1629 = vsel %vm1597, %v1613, %v1435
        %v1630 = vsel %vm1598, %v1614, %v1436
        %v1631 = vsel %vm1599, %v1615, %v1437
        %v1632 = vlaneseq
        %v1633 = vshrl.u32 %v1632, 7
        %v1634 = vsub.s32 4, %v1633
        %v1635 = vrot.slane %v864, %v1634
        %v1636 = vsub.f32 %v499, %v1635
        %v1637 = vsub.f32 %v504, %v1635
        %v1638 = vsub.f32 %v509, %v1635
        %v1639 = vsub.f32 %v514, %v1635
        %v1640 = vsub.f32 %v519, %v1635
        %v1641 = vsub.f32 %v524, %v1635
        %v1642 = vsub.f32 %v529, %v1635
        %v1643 = vsub.f32 %v534, %v1635
        %v1644 = vsub.f32 %v539, %v1635
        %v1645 = vsub.f32 %v544, %v1635
        %v1646 = vsub.f32 %v549, %v1635
        %v1647 = vsub.f32 %v554, %v1635
        %v1648 = vsub.f32 %v559, %v1635
        %v1649 = vsub.f32 %v564, %v1635
        %v1650 = vsub.f32 %v569, %v1635
        %v1651 = vsub.f32 %v574, %v1635
        %v1652 = vlaneseq
        %v1653 = vshrl.u32 %v1652, 7
        %v1654 = vsub.s32 4, %v1653
        %v1655 = vrot.slane %v865, %v1654
        %v1656 = vsub.f32 %v595, %v1655
        %v1657 = vsub.f32 %v600, %v1655
        %v1658 = vsub.f32 %v605, %v1655
        %v1659 = vsub.f32 %v610, %v1655
        %v1660 = vsub.f32 %v615, %v1655
        %v1661 = vsub.f32 %v620, %v1655
        %v1662 = vsub.f32 %v625, %v1655
        %v1663 = vsub.f32 %v630, %v1655
        %v1664 = vsub.f32 %v635, %v1655
        %v1665 = vsub.f32 %v640, %v1655
        %v1666 = vsub.f32 %v645, %v1655
        %v1667 = vsub.f32 %v650, %v1655
        %v1668 = vsub.f32 %v655, %v1655
        %v1669 = vsub.f32 %v660, %v1655
        %v1670 = vsub.f32 %v665, %v1655
        %v1671 = vsub.f32 %v670, %v1655
        %v1672 = vmul.f32 %v1636, %v1636
        %v1673 = vmul.f32 %v1637, %v1637
        %v1674 = vmul.f32 %v1638, %v1638
        %v1675 = vmul.f32 %v1639, %v1639
        %v1676 = vmul.f32 %v1640, %v1640
        %v1677 = vmul.f32 %v1641, %v1641
        %v1678 = vmul.f32 %v1642, %v1642
        %v1679 = vmul.f32 %v1643, %v1643
        %v1680 = vmul.f32 %v1644, %v1644
        %v1681 = vmul.f32 %v1645, %v1645
        %v1682 = vmul.f32 %v1646, %v1646
        %v1683 = vmul.f32 %v1647, %v1647
        %v1684 = vmul.f32 %v1648, %v1648
        %v1685 = vmul.f32 %v1649, %v1649
        %v1686 = vmul.f32 %v1650, %v1650
        %v1687 = vmul.f32 %v1651, %v1651
        %v1688 = vmul.f32 %v1656, %v1656
        %v1689 = vmul.f32 %v1657, %v1657
        %v1690 = vmul.f32 %v1658, %v1658
        %v1691 = vmul.f32 %v1659, %v1659
        %v1692 = vmul.f32 %v1660, %v1660
        %v1693 = vmul.f32 %v1661, %v1661
        %v1694 = vmul.f32 %v1662, %v1662
        %v1695 = vmul.f32 %v1663, %v1663
        %v1696 = vmul.f32 %v1664, %v1664
        %v1697 = vmul.f32 %v1665, %v1665
        %v1698 = vmul.f32 %v1666, %v1666
        %v1699 = vmul.f32 %v1667, %v1667
        %v1700 = vmul.f32 %v1668, %v1668
        %v1701 = vmul.f32 %v1669, %v1669
        %v1702 = vmul.f32 %v1670, %v1670
        %v1703 = vmul.f32 %v1671, %v1671
        %v1704 = vadd.f32 %v1672, %v1688
        %v1705 = vadd.f32 %v1673, %v1689
        %v1706 = vadd.f32 %v1674, %v1690
        %v1707 = vadd.f32 %v1675, %v1691
        %v1708 = vadd.f32 %v1676, %v1692
        %v1709 = vadd.f32 %v1677, %v1693
        %v1710 = vadd.f32 %v1678, %v1694
        %v1711 = vadd.f32 %v1679, %v1695
        %v1712 = vadd.f32 %v1680, %v1696
        %v1713 = vadd.f32 %v1681, %v1697
        %v1714 = vadd.f32 %v1682, %v1698
        %v1715 = vadd.f32 %v1683, %v1699
        %v1716 = vadd.f32 %v1684, %v1700
        %v1717 = vadd.f32 %v1685, %v1701
        %v1718 = vadd.f32 %v1686, %v1702
        %v1719 = vadd.f32 %v1687, %v1703
        %v1720 = vlaneseq
        %v1721 = vshrl.u32 %v1720, 7
        %v1722 = vsub.s32 4, %v1721
        %v1723 = vrot.slane %v958, %v1722
        %vm1724 = vcmp.eq.s32.totalorder %v1723, 1
        %vm1725 = vmxor %vm752, %vm1724
        %vm1726 = vmxor %vm753, %vm1724
        %vm1727 = vmxor %vm754, %vm1724
        %vm1728 = vmxor %vm755, %vm1724
        %vm1729 = vmxor %vm756, %vm1724
        %vm1730 = vmxor %vm757, %vm1724
        %vm1731 = vmxor %vm758, %vm1724
        %vm1732 = vmxor %vm759, %vm1724
        %vm1733 = vmxor %vm760, %vm1724
        %vm1734 = vmxor %vm761, %vm1724
        %vm1735 = vmxor %vm762, %vm1724
        %vm1736 = vmxor %vm763, %vm1724
        %vm1737 = vmxor %vm764, %vm1724
        %vm1738 = vmxor %vm765, %vm1724
        %vm1739 = vmxor %vm766, %vm1724
        %vm1740 = vmxor %vm767, %vm1724
        %v1741 = vmin.f32 %v1563, %v1704
        %v1742 = vmin.f32 %v1564, %v1705
        %v1743 = vmin.f32 %v1565, %v1706
        %v1744 = vmin.f32 %v1566, %v1707
        %v1745 = vmin.f32 %v1567, %v1708
        %v1746 = vmin.f32 %v1568, %v1709
        %v1747 = vmin.f32 %v1569, %v1710
        %v1748 = vmin.f32 %v1570, %v1711
        %v1749 = vmin.f32 %v1571, %v1712
        %v1750 = vmin.f32 %v1572, %v1713
        %v1751 = vmin.f32 %v1573, %v1714
        %v1752 = vmin.f32 %v1574, %v1715
        %v1753 = vmin.f32 %v1575, %v1716
        %v1754 = vmin.f32 %v1576, %v1717
        %v1755 = vmin.f32 %v1577, %v1718
        %v1756 = vmin.f32 %v1578, %v1719
        %v1757 = vsel %vm1725, %v1741, %v1563
        %v1758 = vsel %vm1726, %v1742, %v1564
        %v1759 = vsel %vm1727, %v1743, %v1565
        %v1760 = vsel %vm1728, %v1744, %v1566
        %v1761 = vsel %vm1729, %v1745, %v1567
        %v1762 = vsel %vm1730, %v1746, %v1568
        %v1763 = vsel %vm1731, %v1747, %v1569
        %v1764 = vsel %vm1732, %v1748, %v1570
        %v1765 = vsel %vm1733, %v1749, %v1571
        %v1766 = vsel %vm1734, %v1750, %v1572
        %v1767 = vsel %vm1735, %v1751, %v1573
        %v1768 = vsel %vm1736, %v1752, %v1574
        %v1769 = vsel %vm1737, %v1753, %v1575
        %v1770 = vsel %vm1738, %v1754, %v1576
        %v1771 = vsel %vm1739, %v1755, %v1577
        %v1772 = vsel %vm1740, %v1756, %v1578
        %v1773 = vlaneseq
        %v1774 = vshrl.u32 %v1773, 7
        %v1775 = vsub.s32 4, %v1774
        %v1776 = vrot.slane %v1012, %v1775
        %vm1777 = vcmp.eq.s32.totalorder %v1776, 1
        %vm1778 = vmxor %vm848, %vm1777
        %vm1779 = vmxor %vm849, %vm1777
        %vm1780 = vmxor %vm850, %vm1777
        %vm1781 = vmxor %vm851, %vm1777
        %vm1782 = vmxor %vm852, %vm1777
        %vm1783 = vmxor %vm853, %vm1777
        %vm1784 = vmxor %vm854, %vm1777
        %vm1785 = vmxor %vm855, %vm1777
        %vm1786 = vmxor %vm856, %vm1777
        %vm1787 = vmxor %vm857, %vm1777
        %vm1788 = vmxor %vm858, %vm1777
        %vm1789 = vmxor %vm859, %vm1777
        %vm1790 = vmxor %vm860, %vm1777
        %vm1791 = vmxor %vm861, %vm1777
        %vm1792 = vmxor %vm862, %vm1777
        %vm1793 = vmxor %vm863, %vm1777
        %v1794 = vmin.f32 %v1616, %v1704
        %v1795 = vmin.f32 %v1617, %v1705
        %v1796 = vmin.f32 %v1618, %v1706
        %v1797 = vmin.f32 %v1619, %v1707
        %v1798 = vmin.f32 %v1620, %v1708
        %v1799 = vmin.f32 %v1621, %v1709
        %v1800 = vmin.f32 %v1622, %v1710
        %v1801 = vmin.f32 %v1623, %v1711
        %v1802 = vmin.f32 %v1624, %v1712
        %v1803 = vmin.f32 %v1625, %v1713
        %v1804 = vmin.f32 %v1626, %v1714
        %v1805 = vmin.f32 %v1627, %v1715
        %v1806 = vmin.f32 %v1628, %v1716
        %v1807 = vmin.f32 %v1629, %v1717
        %v1808 = vmin.f32 %v1630, %v1718
        %v1809 = vmin.f32 %v1631, %v1719
        %v1810 = vsel %vm1778, %v1794, %v1616
        %v1811 = vsel %vm1779, %v1795, %v1617
        %v1812 = vsel %vm1780, %v1796, %v1618
        %v1813 = vsel %vm1781, %v1797, %v1619
        %v1814 = vsel %vm1782, %v1798, %v1620
        %v1815 = vsel %vm1783, %v1799, %v1621
        %v1816 = vsel %vm1784, %v1800, %v1622
        %v1817 = vsel %vm1785, %v1801, %v1623
        %v1818 = vsel %vm1786, %v1802, %v1624
        %v1819 = vsel %vm1787, %v1803, %v1625
        %v1820 = vsel %vm1788, %v1804, %v1626
        %v1821 = vsel %vm1789, %v1805, %v1627
        %v1822 = vsel %vm1790, %v1806, %v1628
        %v1823 = vsel %vm1791, %v1807, %v1629
        %v1824 = vsel %vm1792, %v1808, %v1630
        %v1825 = vsel %vm1793, %v1809, %v1631
        %v1826 = vlaneseq
        %v1827 = vshrl.u32 %v1826, 7
        %v1828 = vsub.s32 5, %v1827
        %v1829 = vrot.slane %v864, %v1828
        %v1830 = vsub.f32 %v499, %v1829
        %v1831 = vsub.f32 %v504, %v1829
        %v1832 = vsub.f32 %v509, %v1829
        %v1833 = vsub.f32 %v514, %v1829
        %v1834 = vsub.f32 %v519, %v1829
        %v1835 = vsub.f32 %v524, %v1829
        %v1836 = vsub.f32 %v529, %v1829
        %v1837 = vsub.f32 %v534, %v1829
        %v1838 = vsub.f32 %v539, %v1829
        %v1839 = vsub.f32 %v544, %v1829
        %v1840 = vsub.f32 %v549, %v1829
        %v1841 = vsub.f32 %v554, %v1829
        %v1842 = vsub.f32 %v559, %v1829
        %v1843 = vsub.f32 %v564, %v1829
        %v1844 = vsub.f32 %v569, %v1829
        %v1845 = vsub.f32 %v574, %v1829
        %v1846 = vlaneseq
        %v1847 = vshrl.u32 %v1846, 7
        %v1848 = vsub.s32 5, %v1847
        %v1849 = vrot.slane %v865, %v1848
        %v1850 = vsub.f32 %v595, %v1849
        %v1851 = vsub.f32 %v600, %v1849
        %v1852 = vsub.f32 %v605, %v1849
        %v1853 = vsub.f32 %v610, %v1849
        %v1854 = vsub.f32 %v615, %v1849
        %v1855 = vsub.f32 %v620, %v1849
        %v1856 = vsub.f32 %v625, %v1849
        %v1857 = vsub.f32 %v630, %v1849
        %v1858 = vsub.f32 %v635, %v1849
        %v1859 = vsub.f32 %v640, %v1849
        %v1860 = vsub.f32 %v645, %v1849
        %v1861 = vsub.f32 %v650, %v1849
        %v1862 = vsub.f32 %v655, %v1849
        %v1863 = vsub.f32 %v660, %v1849
        %v1864 = vsub.f32 %v665, %v1849
        %v1865 = vsub.f32 %v670, %v1849
        %v1866 = vmul.f32 %v1830, %v1830
        %v1867 = vmul.f32 %v1831, %v1831
        %v1868 = vmul.f32 %v1832, %v1832
        %v1869 = vmul.f32 %v1833, %v1833
        %v1870 = vmul.f32 %v1834, %v1834
        %v1871 = vmul.f32 %v1835, %v1835
        %v1872 = vmul.f32 %v1836, %v1836
        %v1873 = vmul.f32 %v1837, %v1837
        %v1874 = vmul.f32 %v1838, %v1838
        %v1875 = vmul.f32 %v1839, %v1839
        %v1876 = vmul.f32 %v1840, %v1840
        %v1877 = vmul.f32 %v1841, %v1841
        %v1878 = vmul.f32 %v1842, %v1842
        %v1879 = vmul.f32 %v1843, %v1843
        %v1880 = vmul.f32 %v1844, %v1844
        %v1881 = vmul.f32 %v1845, %v1845
        %v1882 = vmul.f32 %v1850, %v1850
        %v1883 = vmul.f32 %v1851, %v1851
        %v1884 = vmul.f32 %v1852, %v1852
        %v1885 = vmul.f32 %v1853, %v1853
        %v1886 = vmul.f32 %v1854, %v1854
        %v1887 = vmul.f32 %v1855, %v1855
        %v1888 = vmul.f32 %v1856, %v1856
        %v1889 = vmul.f32 %v1857, %v1857
        %v1890 = vmul.f32 %v1858, %v1858
        %v1891 = vmul.f32 %v1859, %v1859
        %v1892 = vmul.f32 %v1860, %v1860
        %v1893 = vmul.f32 %v1861, %v1861
        %v1894 = vmul.f32 %v1862, %v1862
        %v1895 = vmul.f32 %v1863, %v1863
        %v1896 = vmul.f32 %v1864, %v1864
        %v1897 = vmul.f32 %v1865, %v1865
        %v1898 = vadd.f32 %v1866, %v1882
        %v1899 = vadd.f32 %v1867, %v1883
        %v1900 = vadd.f32 %v1868, %v1884
        %v1901 = vadd.f32 %v1869, %v1885
        %v1902 = vadd.f32 %v1870, %v1886
        %v1903 = vadd.f32 %v1871, %v1887
        %v1904 = vadd.f32 %v1872, %v1888
        %v1905 = vadd.f32 %v1873, %v1889
        %v1906 = vadd.f32 %v1874, %v1890
        %v1907 = vadd.f32 %v1875, %v1891
        %v1908 = vadd.f32 %v1876, %v1892
        %v1909 = vadd.f32 %v1877, %v1893
        %v1910 = vadd.f32 %v1878, %v1894
        %v1911 = vadd.f32 %v1879, %v1895
        %v1912 = vadd.f32 %v1880, %v1896
        %v1913 = vadd.f32 %v1881, %v1897
        %v1914 = vlaneseq
        %v1915 = vshrl.u32 %v1914, 7
        %v1916 = vsub.s32 5, %v1915
        %v1917 = vrot.slane %v958, %v1916
        %vm1918 = vcmp.eq.s32.totalorder %v1917, 1
        %vm1919 = vmxor %vm752, %vm1918
        %vm1920 = vmxor %vm753, %vm1918
        %vm1921 = vmxor %vm754, %vm1918
        %vm1922 = vmxor %vm755, %vm1918
        %vm1923 = vmxor %vm756, %vm1918
        %vm1924 = vmxor %vm757, %vm1918
        %vm1925 = vmxor %vm758, %vm1918
        %vm1926 = vmxor %vm759, %vm1918
        %vm1927 = vmxor %vm760, %vm1918
        %vm1928 = vmxor %vm761, %vm1918
        %vm1929 = vmxor %vm762, %vm1918
        %vm1930 = vmxor %vm763, %vm1918
        %vm1931 = vmxor %vm764, %vm1918
        %vm1932 = vmxor %vm765, %vm1918
        %vm1933 = vmxor %vm766, %vm1918
        %vm1934 = vmxor %vm767, %vm1918
        %v1935 = vmin.f32 %v1757, %v1898
        %v1936 = vmin.f32 %v1758, %v1899
        %v1937 = vmin.f32 %v1759, %v1900
        %v1938 = vmin.f32 %v1760, %v1901
        %v1939 = vmin.f32 %v1761, %v1902
        %v1940 = vmin.f32 %v1762, %v1903
        %v1941 = vmin.f32 %v1763, %v1904
        %v1942 = vmin.f32 %v1764, %v1905
        %v1943 = vmin.f32 %v1765, %v1906
        %v1944 = vmin.f32 %v1766, %v1907
        %v1945 = vmin.f32 %v1767, %v1908
        %v1946 = vmin.f32 %v1768, %v1909
        %v1947 = vmin.f32 %v1769, %v1910
        %v1948 = vmin.f32 %v1770, %v1911
        %v1949 = vmin.f32 %v1771, %v1912
        %v1950 = vmin.f32 %v1772, %v1913
        %v1951 = vsel %vm1919, %v1935, %v1757
        %v1952 = vsel %vm1920, %v1936, %v1758
        %v1953 = vsel %vm1921, %v1937, %v1759
        %v1954 = vsel %vm1922, %v1938, %v1760
        %v1955 = vsel %vm1923, %v1939, %v1761
        %v1956 = vsel %vm1924, %v1940, %v1762
        %v1957 = vsel %vm1925, %v1941, %v1763
        %v1958 = vsel %vm1926, %v1942, %v1764
        %v1959 = vsel %vm1927, %v1943, %v1765
        %v1960 = vsel %vm1928, %v1944, %v1766
        %v1961 = vsel %vm1929, %v1945, %v1767
        %v1962 = vsel %vm1930, %v1946, %v1768
        %v1963 = vsel %vm1931, %v1947, %v1769
        %v1964 = vsel %vm1932, %v1948, %v1770
        %v1965 = vsel %vm1933, %v1949, %v1771
        %v1966 = vsel %vm1934, %v1950, %v1772
        %v1967 = vlaneseq
        %v1968 = vshrl.u32 %v1967, 7
        %v1969 = vsub.s32 5, %v1968
        %v1970 = vrot.slane %v1012, %v1969
        %vm1971 = vcmp.eq.s32.totalorder %v1970, 1
        %vm1972 = vmxor %vm848, %vm1971
        %vm1973 = vmxor %vm849, %vm1971
        %vm1974 = vmxor %vm850, %vm1971
        %vm1975 = vmxor %vm851, %vm1971
        %vm1976 = vmxor %vm852, %vm1971
        %vm1977 = vmxor %vm853, %vm1971
        %vm1978 = vmxor %vm854, %vm1971
        %vm1979 = vmxor %vm855, %vm1971
        %vm1980 = vmxor %vm856, %vm1971
        %vm1981 = vmxor %vm857, %vm1971
        %vm1982 = vmxor %vm858, %vm1971
        %vm1983 = vmxor %vm859, %vm1971
        %vm1984 = vmxor %vm860, %vm1971
        %vm1985 = vmxor %vm861, %vm1971
        %vm1986 = vmxor %vm862, %vm1971
        %vm1987 = vmxor %vm863, %vm1971
        %v1988 = vmin.f32 %v1810, %v1898
        %v1989 = vmin.f32 %v1811, %v1899
        %v1990 = vmin.f32 %v1812, %v1900
        %v1991 = vmin.f32 %v1813, %v1901
        %v1992 = vmin.f32 %v1814, %v1902
        %v1993 = vmin.f32 %v1815, %v1903
        %v1994 = vmin.f32 %v1816, %v1904
        %v1995 = vmin.f32 %v1817, %v1905
        %v1996 = vmin.f32 %v1818, %v1906
        %v1997 = vmin.f32 %v1819, %v1907
        %v1998 = vmin.f32 %v1820, %v1908
        %v1999 = vmin.f32 %v1821, %v1909
        %v2000 = vmin.f32 %v1822, %v1910
        %v2001 = vmin.f32 %v1823, %v1911
        %v2002 = vmin.f32 %v1824, %v1912
        %v2003 = vmin.f32 %v1825, %v1913
        %v2004 = vsel %vm1972, %v1988, %v1810
        %v2005 = vsel %vm1973, %v1989, %v1811
        %v2006 = vsel %vm1974, %v1990, %v1812
        %v2007 = vsel %vm1975, %v1991, %v1813
        %v2008 = vsel %vm1976, %v1992, %v1814
        %v2009 = vsel %vm1977, %v1993, %v1815
        %v2010 = vsel %vm1978, %v1994, %v1816
        %v2011 = vsel %vm1979, %v1995, %v1817
        %v2012 = vsel %vm1980, %v1996, %v1818
        %v2013 = vsel %vm1981, %v1997, %v1819
        %v2014 = vsel %vm1982, %v1998, %v1820
        %v2015 = vsel %vm1983, %v1999, %v1821
        %v2016 = vsel %vm1984, %v2000, %v1822
        %v2017 = vsel %vm1985, %v2001, %v1823
        %v2018 = vsel %vm1986, %v2002, %v1824
        %v2019 = vsel %vm1987, %v2003, %v1825
        %v2020 = vlaneseq
        %v2021 = vshrl.u32 %v2020, 7
        %v2022 = vsub.s32 6, %v2021
        %v2023 = vrot.slane %v864, %v2022
        %v2024 = vsub.f32 %v499, %v2023
        %v2025 = vsub.f32 %v504, %v2023
        %v2026 = vsub.f32 %v509, %v2023
        %v2027 = vsub.f32 %v514, %v2023
        %v2028 = vsub.f32 %v519, %v2023
        %v2029 = vsub.f32 %v524, %v2023
        %v2030 = vsub.f32 %v529, %v2023
        %v2031 = vsub.f32 %v534, %v2023
        %v2032 = vsub.f32 %v539, %v2023
        %v2033 = vsub.f32 %v544, %v2023
        %v2034 = vsub.f32 %v549, %v2023
        %v2035 = vsub.f32 %v554, %v2023
        %v2036 = vsub.f32 %v559, %v2023
        %v2037 = vsub.f32 %v564, %v2023
        %v2038 = vsub.f32 %v569, %v2023
        %v2039 = vsub.f32 %v574, %v2023
        %v2040 = vlaneseq
        %v2041 = vshrl.u32 %v2040, 7
        %v2042 = vsub.s32 6, %v2041
        %v2043 = vrot.slane %v865, %v2042
        %v2044 = vsub.f32 %v595, %v2043
        %v2045 = vsub.f32 %v600, %v2043
        %v2046 = vsub.f32 %v605, %v2043
        %v2047 = vsub.f32 %v610, %v2043
        %v2048 = vsub.f32 %v615, %v2043
        %v2049 = vsub.f32 %v620, %v2043
        %v2050 = vsub.f32 %v625, %v2043
        %v2051 = vsub.f32 %v630, %v2043
        %v2052 = vsub.f32 %v635, %v2043
        %v2053 = vsub.f32 %v640, %v2043
        %v2054 = vsub.f32 %v645, %v2043
        %v2055 = vsub.f32 %v650, %v2043
        %v2056 = vsub.f32 %v655, %v2043
        %v2057 = vsub.f32 %v660, %v2043
        %v2058 = vsub.f32 %v665, %v2043
        %v2059 = vsub.f32 %v670, %v2043
        %v2060 = vmul.f32 %v2024, %v2024
        %v2061 = vmul.f32 %v2025, %v2025
        %v2062 = vmul.f32 %v2026, %v2026
        %v2063 = vmul.f32 %v2027, %v2027
        %v2064 = vmul.f32 %v2028, %v2028
        %v2065 = vmul.f32 %v2029, %v2029
        %v2066 = vmul.f32 %v2030, %v2030
        %v2067 = vmul.f32 %v2031, %v2031
        %v2068 = vmul.f32 %v2032, %v2032
        %v2069 = vmul.f32 %v2033, %v2033
        %v2070 = vmul.f32 %v2034, %v2034
        %v2071 = vmul.f32 %v2035, %v2035
        %v2072 = vmul.f32 %v2036, %v2036
        %v2073 = vmul.f32 %v2037, %v2037
        %v2074 = vmul.f32 %v2038, %v2038
        %v2075 = vmul.f32 %v2039, %v2039
        %v2076 = vmul.f32 %v2044, %v2044
        %v2077 = vmul.f32 %v2045, %v2045
        %v2078 = vmul.f32 %v2046, %v2046
        %v2079 = vmul.f32 %v2047, %v2047
        %v2080 = vmul.f32 %v2048, %v2048
        %v2081 = vmul.f32 %v2049, %v2049
        %v2082 = vmul.f32 %v2050, %v2050
        %v2083 = vmul.f32 %v2051, %v2051
        %v2084 = vmul.f32 %v2052, %v2052
        %v2085 = vmul.f32 %v2053, %v2053
        %v2086 = vmul.f32 %v2054, %v2054
        %v2087 = vmul.f32 %v2055, %v2055
        %v2088 = vmul.f32 %v2056, %v2056
        %v2089 = vmul.f32 %v2057, %v2057
        %v2090 = vmul.f32 %v2058, %v2058
        %v2091 = vmul.f32 %v2059, %v2059
        %v2092 = vadd.f32 %v2060, %v2076
        %v2093 = vadd.f32 %v2061, %v2077
        %v2094 = vadd.f32 %v2062, %v2078
        %v2095 = vadd.f32 %v2063, %v2079
        %v2096 = vadd.f32 %v2064, %v2080
        %v2097 = vadd.f32 %v2065, %v2081
        %v2098 = vadd.f32 %v2066, %v2082
        %v2099 = vadd.f32 %v2067, %v2083
        %v2100 = vadd.f32 %v2068, %v2084
        %v2101 = vadd.f32 %v2069, %v2085
        %v2102 = vadd.f32 %v2070, %v2086
        %v2103 = vadd.f32 %v2071, %v2087
        %v2104 = vadd.f32 %v2072, %v2088
        %v2105 = vadd.f32 %v2073, %v2089
        %v2106 = vadd.f32 %v2074, %v2090
        %v2107 = vadd.f32 %v2075, %v2091
        %v2108 = vlaneseq
        %v2109 = vshrl.u32 %v2108, 7
        %v2110 = vsub.s32 6, %v2109
        %v2111 = vrot.slane %v958, %v2110
        %vm2112 = vcmp.eq.s32.totalorder %v2111, 1
        %vm2113 = vmxor %vm752, %vm2112
        %vm2114 = vmxor %vm753, %vm2112
        %vm2115 = vmxor %vm754, %vm2112
        %vm2116 = vmxor %vm755, %vm2112
        %vm2117 = vmxor %vm756, %vm2112
        %vm2118 = vmxor %vm757, %vm2112
        %vm2119 = vmxor %vm758, %vm2112
        %vm2120 = vmxor %vm759, %vm2112
        %vm2121 = vmxor %vm760, %vm2112
        %vm2122 = vmxor %vm761, %vm2112
        %vm2123 = vmxor %vm762, %vm2112
        %vm2124 = vmxor %vm763, %vm2112
        %vm2125 = vmxor %vm764, %vm2112
        %vm2126 = vmxor %vm765, %vm2112
        %vm2127 = vmxor %vm766, %vm2112
        %vm2128 = vmxor %vm767, %vm2112
        %v2129 = vmin.f32 %v1951, %v2092
        %v2130 = vmin.f32 %v1952, %v2093
        %v2131 = vmin.f32 %v1953, %v2094
        %v2132 = vmin.f32 %v1954, %v2095
        %v2133 = vmin.f32 %v1955, %v2096
        %v2134 = vmin.f32 %v1956, %v2097
        %v2135 = vmin.f32 %v1957, %v2098
        %v2136 = vmin.f32 %v1958, %v2099
        %v2137 = vmin.f32 %v1959, %v2100
        %v2138 = vmin.f32 %v1960, %v2101
        %v2139 = vmin.f32 %v1961, %v2102
        %v2140 = vmin.f32 %v1962, %v2103
        %v2141 = vmin.f32 %v1963, %v2104
        %v2142 = vmin.f32 %v1964, %v2105
        %v2143 = vmin.f32 %v1965, %v2106
        %v2144 = vmin.f32 %v1966, %v2107
        %v2145 = vsel %vm2113, %v2129, %v1951
        %v2146 = vsel %vm2114, %v2130, %v1952
        %v2147 = vsel %vm2115, %v2131, %v1953
        %v2148 = vsel %vm2116, %v2132, %v1954
        %v2149 = vsel %vm2117, %v2133, %v1955
        %v2150 = vsel %vm2118, %v2134, %v1956
        %v2151 = vsel %vm2119, %v2135, %v1957
        %v2152 = vsel %vm2120, %v2136, %v1958
        %v2153 = vsel %vm2121, %v2137, %v1959
        %v2154 = vsel %vm2122, %v2138, %v1960
        %v2155 = vsel %vm2123, %v2139, %v1961
        %v2156 = vsel %vm2124, %v2140, %v1962
        %v2157 = vsel %vm2125, %v2141, %v1963
        %v2158 = vsel %vm2126, %v2142, %v1964
        %v2159 = vsel %vm2127, %v2143, %v1965
        %v2160 = vsel %vm2128, %v2144, %v1966
        %v2161 = vlaneseq
        %v2162 = vshrl.u32 %v2161, 7
        %v2163 = vsub.s32 6, %v2162
        %v2164 = vrot.slane %v1012, %v2163
        %vm2165 = vcmp.eq.s32.totalorder %v2164, 1
        %vm2166 = vmxor %vm848, %vm2165
        %vm2167 = vmxor %vm849, %vm2165
        %vm2168 = vmxor %vm850, %vm2165
        %vm2169 = vmxor %vm851, %vm2165
        %vm2170 = vmxor %vm852, %vm2165
        %vm2171 = vmxor %vm853, %vm2165
        %vm2172 = vmxor %vm854, %vm2165
        %vm2173 = vmxor %vm855, %vm2165
        %vm2174 = vmxor %vm856, %vm2165
        %vm2175 = vmxor %vm857, %vm2165
        %vm2176 = vmxor %vm858, %vm2165
        %vm2177 = vmxor %vm859, %vm2165
        %vm2178 = vmxor %vm860, %vm2165
        %vm2179 = vmxor %vm861, %vm2165
        %vm2180 = vmxor %vm862, %vm2165
        %vm2181 = vmxor %vm863, %vm2165
        %v2182 = vmin.f32 %v2004, %v2092
        %v2183 = vmin.f32 %v2005, %v2093
        %v2184 = vmin.f32 %v2006, %v2094
        %v2185 = vmin.f32 %v2007, %v2095
        %v2186 = vmin.f32 %v2008, %v2096
        %v2187 = vmin.f32 %v2009, %v2097
        %v2188 = vmin.f32 %v2010, %v2098
        %v2189 = vmin.f32 %v2011, %v2099
        %v2190 = vmin.f32 %v2012, %v2100
        %v2191 = vmin.f32 %v2013, %v2101
        %v2192 = vmin.f32 %v2014, %v2102
        %v2193 = vmin.f32 %v2015, %v2103
        %v2194 = vmin.f32 %v2016, %v2104
        %v2195 = vmin.f32 %v2017, %v2105
        %v2196 = vmin.f32 %v2018, %v2106
        %v2197 = vmin.f32 %v2019, %v2107
        %v2198 = vsel %vm2166, %v2182, %v2004
        %v2199 = vsel %vm2167, %v2183, %v2005
        %v2200 = vsel %vm2168, %v2184, %v2006
        %v2201 = vsel %vm2169, %v2185, %v2007
        %v2202 = vsel %vm2170, %v2186, %v2008
        %v2203 = vsel %vm2171, %v2187, %v2009
        %v2204 = vsel %vm2172, %v2188, %v2010
        %v2205 = vsel %vm2173, %v2189, %v2011
        %v2206 = vsel %vm2174, %v2190, %v2012
        %v2207 = vsel %vm2175, %v2191, %v2013
        %v2208 = vsel %vm2176, %v2192, %v2014
        %v2209 = vsel %vm2177, %v2193, %v2015
        %v2210 = vsel %vm2178, %v2194, %v2016
        %v2211 = vsel %vm2179, %v2195, %v2017
        %v2212 = vsel %vm2180, %v2196, %v2018
        %v2213 = vsel %vm2181, %v2197, %v2019
        %v2214 = vlaneseq
        %v2215 = vshrl.u32 %v2214, 7
        %v2216 = vsub.s32 7, %v2215
        %v2217 = vrot.slane %v864, %v2216
        %v2218 = vsub.f32 %v499, %v2217
        %v2219 = vsub.f32 %v504, %v2217
        %v2220 = vsub.f32 %v509, %v2217
        %v2221 = vsub.f32 %v514, %v2217
        %v2222 = vsub.f32 %v519, %v2217
        %v2223 = vsub.f32 %v524, %v2217
        %v2224 = vsub.f32 %v529, %v2217
        %v2225 = vsub.f32 %v534, %v2217
        %v2226 = vsub.f32 %v539, %v2217
        %v2227 = vsub.f32 %v544, %v2217
        %v2228 = vsub.f32 %v549, %v2217
        %v2229 = vsub.f32 %v554, %v2217
        %v2230 = vsub.f32 %v559, %v2217
        %v2231 = vsub.f32 %v564, %v2217
        %v2232 = vsub.f32 %v569, %v2217
        %v2233 = vsub.f32 %v574, %v2217
        %v2234 = vlaneseq
        %v2235 = vshrl.u32 %v2234, 7
        %v2236 = vsub.s32 7, %v2235
        %v2237 = vrot.slane %v865, %v2236
        %v2238 = vsub.f32 %v595, %v2237
        %v2239 = vsub.f32 %v600, %v2237
        %v2240 = vsub.f32 %v605, %v2237
        %v2241 = vsub.f32 %v610, %v2237
        %v2242 = vsub.f32 %v615, %v2237
        %v2243 = vsub.f32 %v620, %v2237
        %v2244 = vsub.f32 %v625, %v2237
        %v2245 = vsub.f32 %v630, %v2237
        %v2246 = vsub.f32 %v635, %v2237
        %v2247 = vsub.f32 %v640, %v2237
        %v2248 = vsub.f32 %v645, %v2237
        %v2249 = vsub.f32 %v650, %v2237
        %v2250 = vsub.f32 %v655, %v2237
        %v2251 = vsub.f32 %v660, %v2237
        %v2252 = vsub.f32 %v665, %v2237
        %v2253 = vsub.f32 %v670, %v2237
        %v2254 = vmul.f32 %v2218, %v2218
        %v2255 = vmul.f32 %v2219, %v2219
        %v2256 = vmul.f32 %v2220, %v2220
        %v2257 = vmul.f32 %v2221, %v2221
        %v2258 = vmul.f32 %v2222, %v2222
        %v2259 = vmul.f32 %v2223, %v2223
        %v2260 = vmul.f32 %v2224, %v2224
        %v2261 = vmul.f32 %v2225, %v2225
        %v2262 = vmul.f32 %v2226, %v2226
        %v2263 = vmul.f32 %v2227, %v2227
        %v2264 = vmul.f32 %v2228, %v2228
        %v2265 = vmul.f32 %v2229, %v2229
        %v2266 = vmul.f32 %v2230, %v2230
        %v2267 = vmul.f32 %v2231, %v2231
        %v2268 = vmul.f32 %v2232, %v2232
        %v2269 = vmul.f32 %v2233, %v2233
        %v2270 = vmul.f32 %v2238, %v2238
        %v2271 = vmul.f32 %v2239, %v2239
        %v2272 = vmul.f32 %v2240, %v2240
        %v2273 = vmul.f32 %v2241, %v2241
        %v2274 = vmul.f32 %v2242, %v2242
        %v2275 = vmul.f32 %v2243, %v2243
        %v2276 = vmul.f32 %v2244, %v2244
        %v2277 = vmul.f32 %v2245, %v2245
        %v2278 = vmul.f32 %v2246, %v2246
        %v2279 = vmul.f32 %v2247, %v2247
        %v2280 = vmul.f32 %v2248, %v2248
        %v2281 = vmul.f32 %v2249, %v2249
        %v2282 = vmul.f32 %v2250, %v2250
        %v2283 = vmul.f32 %v2251, %v2251
        %v2284 = vmul.f32 %v2252, %v2252
        %v2285 = vmul.f32 %v2253, %v2253
        %v2286 = vadd.f32 %v2254, %v2270
        %v2287 = vadd.f32 %v2255, %v2271
        %v2288 = vadd.f32 %v2256, %v2272
        %v2289 = vadd.f32 %v2257, %v2273
        %v2290 = vadd.f32 %v2258, %v2274
        %v2291 = vadd.f32 %v2259, %v2275
        %v2292 = vadd.f32 %v2260, %v2276
        %v2293 = vadd.f32 %v2261, %v2277
        %v2294 = vadd.f32 %v2262, %v2278
        %v2295 = vadd.f32 %v2263, %v2279
        %v2296 = vadd.f32 %v2264, %v2280
        %v2297 = vadd.f32 %v2265, %v2281
        %v2298 = vadd.f32 %v2266, %v2282
        %v2299 = vadd.f32 %v2267, %v2283
        %v2300 = vadd.f32 %v2268, %v2284
        %v2301 = vadd.f32 %v2269, %v2285
        %v2302 = vlaneseq
        %v2303 = vshrl.u32 %v2302, 7
        %v2304 = vsub.s32 7, %v2303
        %v2305 = vrot.slane %v958, %v2304
        %vm2306 = vcmp.eq.s32.totalorder %v2305, 1
        %vm2307 = vmxor %vm752, %vm2306
        %vm2308 = vmxor %vm753, %vm2306
        %vm2309 = vmxor %vm754, %vm2306
        %vm2310 = vmxor %vm755, %vm2306
        %vm2311 = vmxor %vm756, %vm2306
        %vm2312 = vmxor %vm757, %vm2306
        %vm2313 = vmxor %vm758, %vm2306
        %vm2314 = vmxor %vm759, %vm2306
        %vm2315 = vmxor %vm760, %vm2306
        %vm2316 = vmxor %vm761, %vm2306
        %vm2317 = vmxor %vm762, %vm2306
        %vm2318 = vmxor %vm763, %vm2306
        %vm2319 = vmxor %vm764, %vm2306
        %vm2320 = vmxor %vm765, %vm2306
        %vm2321 = vmxor %vm766, %vm2306
        %vm2322 = vmxor %vm767, %vm2306
        %v2323 = vmin.f32 %v2145, %v2286
        %v2324 = vmin.f32 %v2146, %v2287
        %v2325 = vmin.f32 %v2147, %v2288
        %v2326 = vmin.f32 %v2148, %v2289
        %v2327 = vmin.f32 %v2149, %v2290
        %v2328 = vmin.f32 %v2150, %v2291
        %v2329 = vmin.f32 %v2151, %v2292
        %v2330 = vmin.f32 %v2152, %v2293
        %v2331 = vmin.f32 %v2153, %v2294
        %v2332 = vmin.f32 %v2154, %v2295
        %v2333 = vmin.f32 %v2155, %v2296
        %v2334 = vmin.f32 %v2156, %v2297
        %v2335 = vmin.f32 %v2157, %v2298
        %v2336 = vmin.f32 %v2158, %v2299
        %v2337 = vmin.f32 %v2159, %v2300
        %v2338 = vmin.f32 %v2160, %v2301
        %v2339 = vsel %vm2307, %v2323, %v2145
        %v2340 = vsel %vm2308, %v2324, %v2146
        %v2341 = vsel %vm2309, %v2325, %v2147
        %v2342 = vsel %vm2310, %v2326, %v2148
        %v2343 = vsel %vm2311, %v2327, %v2149
        %v2344 = vsel %vm2312, %v2328, %v2150
        %v2345 = vsel %vm2313, %v2329, %v2151
        %v2346 = vsel %vm2314, %v2330, %v2152
        %v2347 = vsel %vm2315, %v2331, %v2153
        %v2348 = vsel %vm2316, %v2332, %v2154
        %v2349 = vsel %vm2317, %v2333, %v2155
        %v2350 = vsel %vm2318, %v2334, %v2156
        %v2351 = vsel %vm2319, %v2335, %v2157
        %v2352 = vsel %vm2320, %v2336, %v2158
        %v2353 = vsel %vm2321, %v2337, %v2159
        %v2354 = vsel %vm2322, %v2338, %v2160
        %v2355 = vlaneseq
        %v2356 = vshrl.u32 %v2355, 7
        %v2357 = vsub.s32 7, %v2356
        %v2358 = vrot.slane %v1012, %v2357
        %vm2359 = vcmp.eq.s32.totalorder %v2358, 1
        %vm2360 = vmxor %vm848, %vm2359
        %vm2361 = vmxor %vm849, %vm2359
        %vm2362 = vmxor %vm850, %vm2359
        %vm2363 = vmxor %vm851, %vm2359
        %vm2364 = vmxor %vm852, %vm2359
        %vm2365 = vmxor %vm853, %vm2359
        %vm2366 = vmxor %vm854, %vm2359
        %vm2367 = vmxor %vm855, %vm2359
        %vm2368 = vmxor %vm856, %vm2359
        %vm2369 = vmxor %vm857, %vm2359
        %vm2370 = vmxor %vm858, %vm2359
        %vm2371 = vmxor %vm859, %vm2359
        %vm2372 = vmxor %vm860, %vm2359
        %vm2373 = vmxor %vm861, %vm2359
        %vm2374 = vmxor %vm862, %vm2359
        %vm2375 = vmxor %vm863, %vm2359
        %v2376 = vmin.f32 %v2198, %v2286
        %v2377 = vmin.f32 %v2199, %v2287
        %v2378 = vmin.f32 %v2200, %v2288
        %v2379 = vmin.f32 %v2201, %v2289
        %v2380 = vmin.f32 %v2202, %v2290
        %v2381 = vmin.f32 %v2203, %v2291
        %v2382 = vmin.f32 %v2204, %v2292
        %v2383 = vmin.f32 %v2205, %v2293
        %v2384 = vmin.f32 %v2206, %v2294
        %v2385 = vmin.f32 %v2207, %v2295
        %v2386 = vmin.f32 %v2208, %v2296
        %v2387 = vmin.f32 %v2209, %v2297
        %v2388 = vmin.f32 %v2210, %v2298
        %v2389 = vmin.f32 %v2211, %v2299
        %v2390 = vmin.f32 %v2212, %v2300
        %v2391 = vmin.f32 %v2213, %v2301
        %v2392 = vsel %vm2360, %v2376, %v2198
        %v2393 = vsel %vm2361, %v2377, %v2199
        %v2394 = vsel %vm2362, %v2378, %v2200
        %v2395 = vsel %vm2363, %v2379, %v2201
        %v2396 = vsel %vm2364, %v2380, %v2202
        %v2397 = vsel %vm2365, %v2381, %v2203
        %v2398 = vsel %vm2366, %v2382, %v2204
        %v2399 = vsel %vm2367, %v2383, %v2205
        %v2400 = vsel %vm2368, %v2384, %v2206
        %v2401 = vsel %vm2369, %v2385, %v2207
        %v2402 = vsel %vm2370, %v2386, %v2208
        %v2403 = vsel %vm2371, %v2387, %v2209
        %v2404 = vsel %vm2372, %v2388, %v2210
        %v2405 = vsel %vm2373, %v2389, %v2211
        %v2406 = vsel %vm2374, %v2390, %v2212
        %v2407 = vsel %vm2375, %v2391, %v2213
        %2408 = vmin.xlane.f32.xlu0 %v2339
        %v2409 = vpop.xlane.xlu0 %2408
        %2410 = vmin.xlane.f32.xlu0 %v2340
        %v2411 = vpop.xlane.xlu0 %2410
        %2412 = vmin.xlane.f32.xlu0 %v2341
        %v2413 = vpop.xlane.xlu0 %2412
        %2414 = vmin.xlane.f32.xlu0 %v2342
        %v2415 = vpop.xlane.xlu0 %2414
        %2416 = vmin.xlane.f32.xlu0 %v2343
        %v2417 = vpop.xlane.xlu0 %2416
        %2418 = vmin.xlane.f32.xlu0 %v2344
        %v2419 = vpop.xlane.xlu0 %2418
        %2420 = vmin.xlane.f32.xlu0 %v2345
        %v2421 = vpop.xlane.xlu0 %2420
        %2422 = vmin.xlane.f32.xlu0 %v2346
        %v2423 = vpop.xlane.xlu0 %2422
        %2424 = vmin.xlane.f32.xlu0 %v2347
        %v2425 = vpop.xlane.xlu0 %2424
        %2426 = vmin.xlane.f32.xlu0 %v2348
        %v2427 = vpop.xlane.xlu0 %2426
        %2428 = vmin.xlane.f32.xlu0 %v2349
        %v2429 = vpop.xlane.xlu0 %2428
        %2430 = vmin.xlane.f32.xlu0 %v2350
        %v2431 = vpop.xlane.xlu0 %2430
        %2432 = vmin.xlane.f32.xlu0 %v2351
        %v2433 = vpop.xlane.xlu0 %2432
        %2434 = vmin.xlane.f32.xlu0 %v2352
        %v2435 = vpop.xlane.xlu0 %2434
        %2436 = vmin.xlane.f32.xlu0 %v2353
        %v2437 = vpop.xlane.xlu0 %2436
        %2438 = vmin.xlane.f32.xlu0 %v2354
        %v2439 = vpop.xlane.xlu0 %2438
        %2440 = vmin.xlane.f32.xlu0 %v2392
        %v2441 = vpop.xlane.xlu0 %2440
        %2442 = vmin.xlane.f32.xlu0 %v2393
        %v2443 = vpop.xlane.xlu0 %2442
        %2444 = vmin.xlane.f32.xlu0 %v2394
        %v2445 = vpop.xlane.xlu0 %2444
        %2446 = vmin.xlane.f32.xlu0 %v2395
        %v2447 = vpop.xlane.xlu0 %2446
        %2448 = vmin.xlane.f32.xlu0 %v2396
        %v2449 = vpop.xlane.xlu0 %2448
        %2450 = vmin.xlane.f32.xlu0 %v2397
        %v2451 = vpop.xlane.xlu0 %2450
        %2452 = vmin.xlane.f32.xlu0 %v2398
        %v2453 = vpop.xlane.xlu0 %2452
        %2454 = vmin.xlane.f32.xlu0 %v2399
        %v2455 = vpop.xlane.xlu0 %2454
        %2456 = vmin.xlane.f32.xlu0 %v2400
        %v2457 = vpop.xlane.xlu0 %2456
        %2458 = vmin.xlane.f32.xlu0 %v2401
        %v2459 = vpop.xlane.xlu0 %2458
        %2460 = vmin.xlane.f32.xlu0 %v2402
        %v2461 = vpop.xlane.xlu0 %2460
        %2462 = vmin.xlane.f32.xlu0 %v2403
        %v2463 = vpop.xlane.xlu0 %2462
        %2464 = vmin.xlane.f32.xlu0 %v2404
        %v2465 = vpop.xlane.xlu0 %2464
        %2466 = vmin.xlane.f32.xlu0 %v2405
        %v2467 = vpop.xlane.xlu0 %2466
        %2468 = vmin.xlane.f32.xlu0 %v2406
        %v2469 = vpop.xlane.xlu0 %2468
        %2470 = vmin.xlane.f32.xlu0 %v2407
        %v2471 = vpop.xlane.xlu0 %2470
        %vm2472 = vcmp.ge.f32.partialorder %v2409, 1e+30
        %vm2473 = vcmp.ge.f32.partialorder %v2411, 1e+30
        %vm2474 = vcmp.ge.f32.partialorder %v2413, 1e+30
        %vm2475 = vcmp.ge.f32.partialorder %v2415, 1e+30
        %vm2476 = vcmp.ge.f32.partialorder %v2417, 1e+30
        %vm2477 = vcmp.ge.f32.partialorder %v2419, 1e+30
        %vm2478 = vcmp.ge.f32.partialorder %v2421, 1e+30
        %vm2479 = vcmp.ge.f32.partialorder %v2423, 1e+30
        %vm2480 = vcmp.ge.f32.partialorder %v2425, 1e+30
        %vm2481 = vcmp.ge.f32.partialorder %v2427, 1e+30
        %vm2482 = vcmp.ge.f32.partialorder %v2429, 1e+30
        %vm2483 = vcmp.ge.f32.partialorder %v2431, 1e+30
        %vm2484 = vcmp.ge.f32.partialorder %v2433, 1e+30
        %vm2485 = vcmp.ge.f32.partialorder %v2435, 1e+30
        %vm2486 = vcmp.ge.f32.partialorder %v2437, 1e+30
        %vm2487 = vcmp.ge.f32.partialorder %v2439, 1e+30
        %v2488 = vsel %vm2472, 0.0, %v2409
        %v2489 = vsel %vm2473, 0.0, %v2411
        %v2490 = vsel %vm2474, 0.0, %v2413
        %v2491 = vsel %vm2475, 0.0, %v2415
        %v2492 = vsel %vm2476, 0.0, %v2417
        %v2493 = vsel %vm2477, 0.0, %v2419
        %v2494 = vsel %vm2478, 0.0, %v2421
        %v2495 = vsel %vm2479, 0.0, %v2423
        %v2496 = vsel %vm2480, 0.0, %v2425
        %v2497 = vsel %vm2481, 0.0, %v2427
        %v2498 = vsel %vm2482, 0.0, %v2429
        %v2499 = vsel %vm2483, 0.0, %v2431
        %v2500 = vsel %vm2484, 0.0, %v2433
        %v2501 = vsel %vm2485, 0.0, %v2435
        %v2502 = vsel %vm2486, 0.0, %v2437
        %v2503 = vsel %vm2487, 0.0, %v2439
        %vm2504 = vcmp.ge.f32.partialorder %v2441, 1e+30
        %vm2505 = vcmp.ge.f32.partialorder %v2443, 1e+30
        %vm2506 = vcmp.ge.f32.partialorder %v2445, 1e+30
        %vm2507 = vcmp.ge.f32.partialorder %v2447, 1e+30
        %vm2508 = vcmp.ge.f32.partialorder %v2449, 1e+30
        %vm2509 = vcmp.ge.f32.partialorder %v2451, 1e+30
        %vm2510 = vcmp.ge.f32.partialorder %v2453, 1e+30
        %vm2511 = vcmp.ge.f32.partialorder %v2455, 1e+30
        %vm2512 = vcmp.ge.f32.partialorder %v2457, 1e+30
        %vm2513 = vcmp.ge.f32.partialorder %v2459, 1e+30
        %vm2514 = vcmp.ge.f32.partialorder %v2461, 1e+30
        %vm2515 = vcmp.ge.f32.partialorder %v2463, 1e+30
        %vm2516 = vcmp.ge.f32.partialorder %v2465, 1e+30
        %vm2517 = vcmp.ge.f32.partialorder %v2467, 1e+30
        %vm2518 = vcmp.ge.f32.partialorder %v2469, 1e+30
        %vm2519 = vcmp.ge.f32.partialorder %v2471, 1e+30
        %v2520 = vsel %vm2504, 0.0, %v2441
        %v2521 = vsel %vm2505, 0.0, %v2443
        %v2522 = vsel %vm2506, 0.0, %v2445
        %v2523 = vsel %vm2507, 0.0, %v2447
        %v2524 = vsel %vm2508, 0.0, %v2449
        %v2525 = vsel %vm2509, 0.0, %v2451
        %v2526 = vsel %vm2510, 0.0, %v2453
        %v2527 = vsel %vm2511, 0.0, %v2455
        %v2528 = vsel %vm2512, 0.0, %v2457
        %v2529 = vsel %vm2513, 0.0, %v2459
        %v2530 = vsel %vm2514, 0.0, %v2461
        %v2531 = vsel %vm2515, 0.0, %v2463
        %v2532 = vsel %vm2516, 0.0, %v2465
        %v2533 = vsel %vm2517, 0.0, %v2467
        %v2534 = vsel %vm2518, 0.0, %v2469
        %v2535 = vsel %vm2519, 0.0, %v2471
        %v2536 = vxor.u32 %v448, 2147483648
        %v2537 = vxor.u32 %v449, 2147483648
        %v2538 = vxor.u32 %v450, 2147483648
        %v2539 = vxor.u32 %v451, 2147483648
        %v2540 = vxor.u32 %v452, 2147483648
        %v2541 = vxor.u32 %v453, 2147483648
        %v2542 = vxor.u32 %v454, 2147483648
        %v2543 = vxor.u32 %v455, 2147483648
        %v2544 = vxor.u32 %v456, 2147483648
        %v2545 = vxor.u32 %v457, 2147483648
        %v2546 = vxor.u32 %v458, 2147483648
        %v2547 = vxor.u32 %v459, 2147483648
        %v2548 = vxor.u32 %v460, 2147483648
        %v2549 = vxor.u32 %v461, 2147483648
        %v2550 = vxor.u32 %v462, 2147483648
        %v2551 = vxor.u32 %v463, 2147483648
        %v2552 = vmul.f32 %v2536, 1.442695
        %v2553 = vpow.pop %v2552
        %v2554 = vmul.f32 %v2537, 1.442695
        %v2555 = vpow.pop %v2554
        %v2556 = vmul.f32 %v2538, 1.442695
        %v2557 = vpow.pop %v2556
        %v2558 = vmul.f32 %v2539, 1.442695
        %v2559 = vpow.pop %v2558
        %v2560 = vmul.f32 %v2540, 1.442695
        %v2561 = vpow.pop %v2560
        %v2562 = vmul.f32 %v2541, 1.442695
        %v2563 = vpow.pop %v2562
        %v2564 = vmul.f32 %v2542, 1.442695
        %v2565 = vpow.pop %v2564
        %v2566 = vmul.f32 %v2543, 1.442695
        %v2567 = vpow.pop %v2566
        %v2568 = vmul.f32 %v2544, 1.442695
        %v2569 = vpow.pop %v2568
        %v2570 = vmul.f32 %v2545, 1.442695
        %v2571 = vpow.pop %v2570
        %v2572 = vmul.f32 %v2546, 1.442695
        %v2573 = vpow.pop %v2572
        %v2574 = vmul.f32 %v2547, 1.442695
        %v2575 = vpow.pop %v2574
        %v2576 = vmul.f32 %v2548, 1.442695
        %v2577 = vpow.pop %v2576
        %v2578 = vmul.f32 %v2549, 1.442695
        %v2579 = vpow.pop %v2578
        %v2580 = vmul.f32 %v2550, 1.442695
        %v2581 = vpow.pop %v2580
        %v2582 = vmul.f32 %v2551, 1.442695
        %v2583 = vpow.pop %v2582
        %v2584 = vadd.f32 %v2553, 1.0
        %v2585 = vadd.f32 %v2555, 1.0
        %v2586 = vadd.f32 %v2557, 1.0
        %v2587 = vadd.f32 %v2559, 1.0
        %v2588 = vadd.f32 %v2561, 1.0
        %v2589 = vadd.f32 %v2563, 1.0
        %v2590 = vadd.f32 %v2565, 1.0
        %v2591 = vadd.f32 %v2567, 1.0
        %v2592 = vadd.f32 %v2569, 1.0
        %v2593 = vadd.f32 %v2571, 1.0
        %v2594 = vadd.f32 %v2573, 1.0
        %v2595 = vadd.f32 %v2575, 1.0
        %v2596 = vadd.f32 %v2577, 1.0
        %v2597 = vadd.f32 %v2579, 1.0
        %v2598 = vadd.f32 %v2581, 1.0
        %v2599 = vadd.f32 %v2583, 1.0
        %v2600 = vrcp.pop %v2584
        %v2601 = vmul.f32 1.0, %v2600
        %v2602 = vrcp.pop %v2585
        %v2603 = vmul.f32 1.0, %v2602
        %v2604 = vrcp.pop %v2586
        %v2605 = vmul.f32 1.0, %v2604
        %v2606 = vrcp.pop %v2587
        %v2607 = vmul.f32 1.0, %v2606
        %v2608 = vrcp.pop %v2588
        %v2609 = vmul.f32 1.0, %v2608
        %v2610 = vrcp.pop %v2589
        %v2611 = vmul.f32 1.0, %v2610
        %v2612 = vrcp.pop %v2590
        %v2613 = vmul.f32 1.0, %v2612
        %v2614 = vrcp.pop %v2591
        %v2615 = vmul.f32 1.0, %v2614
        %v2616 = vrcp.pop %v2592
        %v2617 = vmul.f32 1.0, %v2616
        %v2618 = vrcp.pop %v2593
        %v2619 = vmul.f32 1.0, %v2618
        %v2620 = vrcp.pop %v2594
        %v2621 = vmul.f32 1.0, %v2620
        %v2622 = vrcp.pop %v2595
        %v2623 = vmul.f32 1.0, %v2622
        %v2624 = vrcp.pop %v2596
        %v2625 = vmul.f32 1.0, %v2624
        %v2626 = vrcp.pop %v2597
        %v2627 = vmul.f32 1.0, %v2626
        %v2628 = vrcp.pop %v2598
        %v2629 = vmul.f32 1.0, %v2628
        %v2630 = vrcp.pop %v2599
        %v2631 = vmul.f32 1.0, %v2630
        %v2632 = vsub.f32 %v464, %v2601
        %v2633 = vsub.f32 %v465, %v2603
        %v2634 = vsub.f32 %v466, %v2605
        %v2635 = vsub.f32 %v467, %v2607
        %v2636 = vsub.f32 %v468, %v2609
        %v2637 = vsub.f32 %v469, %v2611
        %v2638 = vsub.f32 %v470, %v2613
        %v2639 = vsub.f32 %v471, %v2615
        %v2640 = vsub.f32 %v472, %v2617
        %v2641 = vsub.f32 %v473, %v2619
        %v2642 = vsub.f32 %v474, %v2621
        %v2643 = vsub.f32 %v475, %v2623
        %v2644 = vsub.f32 %v476, %v2625
        %v2645 = vsub.f32 %v477, %v2627
        %v2646 = vsub.f32 %v478, %v2629
        %v2647 = vsub.f32 %v479, %v2631
        %v2648 = vmul.f32 %v2632, %v2632
        %v2649 = vmul.f32 %v2633, %v2633
        %v2650 = vmul.f32 %v2634, %v2634
        %v2651 = vmul.f32 %v2635, %v2635
        %v2652 = vmul.f32 %v2636, %v2636
        %v2653 = vmul.f32 %v2637, %v2637
        %v2654 = vmul.f32 %v2638, %v2638
        %v2655 = vmul.f32 %v2639, %v2639
        %v2656 = vmul.f32 %v2640, %v2640
        %v2657 = vmul.f32 %v2641, %v2641
        %v2658 = vmul.f32 %v2642, %v2642
        %v2659 = vmul.f32 %v2643, %v2643
        %v2660 = vmul.f32 %v2644, %v2644
        %v2661 = vmul.f32 %v2645, %v2645
        %v2662 = vmul.f32 %v2646, %v2646
        %v2663 = vmul.f32 %v2647, %v2647
        %v2664 = vadd.f32 %v2488, %v2520
        %v2665 = vadd.f32 %v2489, %v2521
        %v2666 = vadd.f32 %v2490, %v2522
        %v2667 = vadd.f32 %v2491, %v2523
        %v2668 = vadd.f32 %v2492, %v2524
        %v2669 = vadd.f32 %v2493, %v2525
        %v2670 = vadd.f32 %v2494, %v2526
        %v2671 = vadd.f32 %v2495, %v2527
        %v2672 = vadd.f32 %v2496, %v2528
        %v2673 = vadd.f32 %v2497, %v2529
        %v2674 = vadd.f32 %v2498, %v2530
        %v2675 = vadd.f32 %v2499, %v2531
        %v2676 = vadd.f32 %v2500, %v2532
        %v2677 = vadd.f32 %v2501, %v2533
        %v2678 = vadd.f32 %v2502, %v2534
        %v2679 = vadd.f32 %v2503, %v2535
        %v2680 = vmul.f32 %v2648, %v2664
        %v2681 = vmul.f32 %v2649, %v2665
        %v2682 = vmul.f32 %v2650, %v2666
        %v2683 = vmul.f32 %v2651, %v2667
        %v2684 = vmul.f32 %v2652, %v2668
        %v2685 = vmul.f32 %v2653, %v2669
        %v2686 = vmul.f32 %v2654, %v2670
        %v2687 = vmul.f32 %v2655, %v2671
        %v2688 = vmul.f32 %v2656, %v2672
        %v2689 = vmul.f32 %v2657, %v2673
        %v2690 = vmul.f32 %v2658, %v2674
        %v2691 = vmul.f32 %v2659, %v2675
        %v2692 = vmul.f32 %v2660, %v2676
        %v2693 = vmul.f32 %v2661, %v2677
        %v2694 = vmul.f32 %v2662, %v2678
        %v2695 = vmul.f32 %v2663, %v2679
        %vm2696 = vcmask 7168
        %v2697 = vsel %vm2696, %v2680, 0.0
        %v2698 = vsel %vm2696, %v2681, 0.0
        %v2699 = vadd.f32 %v2697, %v2698
        %v2700 = vsel %vm2696, %v2682, 0.0
        %v2701 = vadd.f32 %v2699, %v2700
        %v2702 = vsel %vm2696, %v2683, 0.0
        %v2703 = vadd.f32 %v2701, %v2702
        %v2704 = vsel %vm2696, %v2684, 0.0
        %v2705 = vadd.f32 %v2703, %v2704
        %v2706 = vsel %vm2696, %v2685, 0.0
        %v2707 = vadd.f32 %v2705, %v2706
        %v2708 = vsel %vm2696, %v2686, 0.0
        %v2709 = vadd.f32 %v2707, %v2708
        %v2710 = vsel %vm2696, %v2687, 0.0
        %v2711 = vadd.f32 %v2709, %v2710
        %v2712 = vsel %vm2696, %v2688, 0.0
        %v2713 = vadd.f32 %v2711, %v2712
        %v2714 = vsel %vm2696, %v2689, 0.0
        %v2715 = vadd.f32 %v2713, %v2714
        %v2716 = vsel %vm2696, %v2690, 0.0
        %v2717 = vadd.f32 %v2715, %v2716
        %v2718 = vsel %vm2696, %v2691, 0.0
        %v2719 = vadd.f32 %v2717, %v2718
        %v2720 = vsel %vm2696, %v2692, 0.0
        %v2721 = vadd.f32 %v2719, %v2720
        %v2722 = vsel %vm2696, %v2693, 0.0
        %v2723 = vadd.f32 %v2721, %v2722
        %v2724 = vsel %vm2696, %v2694, 0.0
        %v2725 = vadd.f32 %v2723, %v2724
        %v2726 = vsel %vm2696, %v2695, 0.0
        %v2727 = vadd.f32 %v2725, %v2726
        %2728 = vadd.xlane.f32.xlu0 %v2727
        %v2729 = vpop.xlane.xlu0 %2728
        %v2730 = vrot.slane %v2729, 4
        %v2731 = vadd.f32 %v2729, %v2730
        %v2732 = vrot.slane %v2731, 2
        %v2733 = vadd.f32 %v2731, %v2732
        %v2734 = vrot.slane %v2733, 1
        %v2735 = vadd.f32 %v2733, %v2734
        %s2736 = vtos %v2735
        %v2737 = vstv %s2736
        %2738 = vst [vmem:[%s407] sm:$0xff] %v2737
        %s2739 = sand.u32 %s246, 1
        %s2740 = scalar_lea.sflag [#allocation3], %s2739
        %s2741 = sand.u32 %s246, 1
        %s2742 = smul.addr %s2741, 8
        %s2743 = scalar_lea.vmem [#allocation2], %s2742
        // Predicated region
        $region53: #{tpu_custom_call.1} parent=51 // pred_check
          %p2744 = pneg %p256
        $region54: #{tpu_custom_call.1} parent=51 // pred_check_branch
          %2746 = sbr.rel (%p2744) target = $region56
        $region55: #{tpu_custom_call.1} parent=51 // pred_region
          %s2748 = ssub.s32 128, 128
          %2749 = vsyncadd %s2740, %s2748
          %s2750 = smul.addr %s26, 8
          %s2751 = sadd.s32 %s27, %s2750
          %s2752 = smul.addr %s2751, 128
          %s2753 = scalar_lea.hbm %s8, %s2752
          %s2755 = sshll.u32 %s2743, 4
          %s2756 = int_to_ptr.vmem [resolvable:$true] %s2755
          %2758 = dma.vmem_to_hbm [thread:$0]  %s2756, 128, %s2753, %s2740
        $region56: #{tpu_custom_call.1} parent=51 // pred_fallthru
          _
      $region52: #{tpu_custom_call.1} parent=5 // pred_fallthru
        _
      %p2759 = scmp.le.s32.totalorder 2, %s17
      // Predicated region
      $region57: #{tpu_custom_call.1} parent=5 // pred_check
        %p2760 = pneg %p2759
      $region58: #{tpu_custom_call.1} parent=5 // pred_check_branch
        %2762 = sbr.rel (%p2760) target = $region60
      $region59: #{tpu_custom_call.1} parent=5 // pred_region
        %s2763 = ssub.s32 %s17, 2
        // Predicated region
        $region61: #{tpu_custom_call.1} parent=59 // pred_check
          %p2764 = pneg %p262
        $region62: #{tpu_custom_call.1} parent=59 // pred_check_branch
          %2766 = sbr.rel (%p2764) target = $region64
        $region63: #{tpu_custom_call.1} parent=59 // pred_region
          %s2767 = sand.u32 %s247, 1
          %s2768 = scalar_lea.sflag [#allocation3], %s2767
          %s2769 = sand.u32 %s247, 1
          %s2770 = smul.addr %s2769, 8
          %s2771 = scalar_lea.vmem [#allocation2], %s2770
          %2772 = dma.done %s2768, 128
        $region64: #{tpu_custom_call.1} parent=59 // pred_fallthru
          _
      $region60: #{tpu_custom_call.1} parent=5 // pred_fallthru
        _
    $region6: #{tpu_custom_call.1} parent=1 // loop_footer
      %s21 = sadd.s32 1, %s17
    $region7: #{tpu_custom_call.1} parent=1 // loop_footer_branch
      %16 = sbr.rel target = $region3
    $region8: #{tpu_custom_call.1} parent=1 // loop_exit
      _
    %2773 = vsyncpa [#allocation3], 1
    %s2774 = scalar_lea.sflag [#allocation3], 1
    %2775 = vsyncpa %s2774, 1

</llo_original>
